<compile_context>
chip_gen: v7x
topology: tpu7x:2x2x1
jax: 0.10.0
libtpu: 0.0.40
codegen_flags: <defaults>
</compile_context>

<pallas_src>
import math

import numpy as np
import jax
import jax.numpy as jnp
from jax.experimental import pallas as pl
from jax.experimental.pallas import tpu as pltpu

# ----- hyperparameters (match the PyTorch __init__ signature) -----------------
IN_FEATURES = 16
OUT_FEATURES = 8
EMBED_DIM = 32
HEADS_DIM = 8
NUM_HEADS = 4
NUM_LAYERS = 2
BN_EPS = 1e-5
LN_EPS = 1e-5
BATCH = 8

HD = NUM_HEADS * HEADS_DIM          # 32
HH = NUM_HEADS * NUM_HEADS          # 16
HHD = HH * HEADS_DIM                # 128 -> exactly one f32 vreg in lanes
OUT_PAD = 128                       # lane-dense padded output width


# ------------------------------- Pallas kernel --------------------------------
def vector_transformer_kernel(
    x_ref, w_in_ref, b_in_ref,
    w_qkv_ref, b_qkv_ref,           # (L, E, 3*HHD), (L, 1, 3*HHD) fused+replicated
    wo_ref, bo_ref,                 # (L, HHD, E) pre-expanded Wo, (L, 1, E)
    g1_ref, be1_ref,
    wff_ref, bff_ref,
    g2_ref, be2_ref,
    s_mat_ref, g_mat_ref, e_mat_ref,  # (HHD,HH) score-sum, (HH,HH) block-sum, (HH,HHD) expand
    w_out_ref,                      # (E, OUT_PAD) zero-padded output weight
    o_ref,                          # (B, OUT_PAD)
):
    x = x_ref[...].astype(jnp.float32)                        # (B, Fin)

    # --- BatchNorm1d(in_features, affine=False): batch stats, biased variance --
    mu = jnp.mean(x, axis=0, keepdims=True)
    var = jnp.mean((x - mu) ** 2, axis=0, keepdims=True)
    x = (x - mu) * jax.lax.rsqrt(var + BN_EPS)

    # --- input FullyConnectedBlock: Linear -> ReLU (dropout_p == 0) ------------
    x = jnp.dot(x, w_in_ref[...], preferred_element_type=jnp.float32) + b_in_ref[...]
    x = jnp.maximum(x, 0.0)                                    # (B, E)

    def layer_norm(h, gamma, beta):
        m = jnp.mean(h, axis=-1, keepdims=True)
        v = jnp.mean((h - m) ** 2, axis=-1, keepdims=True)
        return (h - m) * jax.lax.rsqrt(v + LN_EPS) * gamma + beta

    s_mat = s_mat_ref[...]
    g_mat = g_mat_ref[...]
    e_mat = e_mat_ref[...]

    for l in range(NUM_LAYERS):
        # fused QKV projection in lane-replicated layout: one 8x32x384 matmul.
        qkv = jnp.dot(x, w_qkv_ref[l], preferred_element_type=jnp.float32) + b_qkv_ref[l]
        q_rep = qkv[:, :HHD]            # (B,128): q_rep[:, 32h+8g+d] = q[:, 8h+d]
        k_til = qkv[:, HHD:2 * HHD]     # (B,128): k_til[:, 32h+8g+d] = k[:, 8g+d]
        v_til = qkv[:, 2 * HHD:]        # (B,128): v_til[:, 32h+8g+d] = v[:, 8g+d]

        # scores (B, H*H): one VPU mul on a full vreg + one selector matmul
        # (1/sqrt(D) scale is folded into s_mat).
        scores = jnp.dot(q_rep * k_til, s_mat, preferred_element_type=jnp.float32)

        # stable softmax over the key-head axis (groups of H lanes).
        # A single row-global max is a valid shift for every block.
        m = jnp.max(scores, axis=-1, keepdims=True)
        p = jnp.exp(scores - m)
        denom = jnp.dot(p, g_mat, preferred_element_type=jnp.float32)  # per-block sums
        a = p * pl.reciprocal(denom, approx=False)

        # per-head context + output projection: expand weights to lanes, multiply,
        # and contract (g,d)->E through the pre-expanded Wo in one matmul.
        a_rep = jnp.dot(a, e_mat, preferred_element_type=jnp.float32)  # (B,128)
        attn = jnp.dot(a_rep * v_til, wo_ref[l],
                       preferred_element_type=jnp.float32) + bo_ref[l]

        x = layer_norm(x + attn, g1_ref[l], be1_ref[l])

        # --- FullyConnectedBlock(E, E): Linear -> ReLU (dropout_p == 0) --------
        ff = jnp.dot(x, wff_ref[l], preferred_element_type=jnp.float32) + bff_ref[l]
        ff = jnp.maximum(ff, 0.0)
        x = layer_norm(x + ff, g2_ref[l], be2_ref[l])

    # --- output Linear(E, out_features, bias=False), lane-dense padded store ---
    o_ref[...] = jnp.dot(x, w_out_ref[...], preferred_element_type=jnp.float32)


# --------------------------- wrapper-side plumbing -----------------------------
def _build_kernel_params(p):
    """Free layout plumbing: fuse/replicate weights and build selector matrices."""
    H, D, E, L = NUM_HEADS, HEADS_DIM, EMBED_DIM, NUM_LAYERS
    scale = 1.0 / math.sqrt(D)

    def rep_heads(w):                 # (..., H*D) -> (..., H*H*D): repeat each head block H times
        lead = w.shape[:-1]
        w4 = w.reshape(*lead, H, 1, D)
        return jnp.broadcast_to(w4, (*lead, H, H, D)).reshape(*lead, H * H * D)

    def tile_heads(w):                # (..., H*D) -> (..., H*H*D): tile all heads H times
        reps = (1,) * (w.ndim - 1) + (H,)
        return jnp.tile(w, reps)

    w_qkv = jnp.concatenate(
        [rep_heads(p["wq"]), tile_heads(p["wk"]), tile_heads(p["wv"])], axis=-1)
    b_qkv = jnp.concatenate(
        [rep_heads(p["bq"]), tile_heads(p["bk"]), tile_heads(p["bv"])], axis=-1)

    # wo_eff[l, 32h+8g+d, e] = wo[l, 8h+d, e]  (so ctx @ wo_eff == o @ wo)
    wo4 = p["wo"].reshape(L, H, 1, D, E)
    wo_eff = jnp.broadcast_to(wo4, (L, H, H, D, E)).reshape(L, H * H * D, E)

    # constant 0/1 selector matrices (score block-sum, softmax block-sum, expand).
    col = np.arange(H * H * D)
    hg_of_col = col // D                           # 4h+g for column 32h+8g+d
    hg = np.arange(H * H)
    s_mat = (hg_of_col[:, None] == hg[None, :]).astype(np.float32) * scale   # (128,16)
    g_mat = ((hg[:, None] // H) == (hg[None, :] // H)).astype(np.float32)    # (16,16)
    e_mat = (hg[:, None] == hg_of_col[None, :]).astype(np.float32)           # (16,128)

    w_out_pad = jnp.zeros((E, OUT_PAD), jnp.float32).at[:, :OUT_FEATURES].set(p["w_out"])

    return dict(
        w_in=p["w_in"], b_in=p["b_in"],
        w_qkv=w_qkv, b_qkv=b_qkv, wo_eff=wo_eff, bo=p["bo"],
        g1=p["g1"], be1=p["be1"], wff=p["wff"], bff=p["bff"],
        g2=p["g2"], be2=p["be2"],
        s_mat=jnp.asarray(s_mat), g_mat=jnp.asarray(g_mat), e_mat=jnp.asarray(e_mat),
        w_out_pad=w_out_pad,
    )


@jax.jit
def vector_transformer(x, p):
    kp = _build_kernel_params(p)
    args = (
        x, kp["w_in"], kp["b_in"],
        kp["w_qkv"], kp["b_qkv"], kp["wo_eff"], kp["bo"],
        kp["g1"], kp["be1"], kp["wff"], kp["bff"], kp["g2"], kp["be2"],
        kp["s_mat"], kp["g_mat"], kp["e_mat"], kp["w_out_pad"],
    )
    vmem = pl.BlockSpec(memory_space=pltpu.MemorySpace.VMEM)
    out = pl.pallas_call(
        vector_transformer_kernel,
        out_shape=jax.ShapeDtypeStruct((x.shape[0], OUT_PAD), jnp.float32),
        in_specs=[vmem] * len(args),
        out_specs=vmem,
    )(*args)
    return out[:, :OUT_FEATURES]


# ----------------------------- parameter init ----------------------------------
def init_params(key):
    def linear(k, fan_in, fan_out, bias=True):
        bound = 1.0 / math.sqrt(fan_in)
        kw, kb = jax.random.split(k)
        w = jax.random.uniform(kw, (fan_in, fan_out), jnp.float32, -bound, bound)
        if not bias:
            return w
        b = jax.random.uniform(kb, (1, fan_out), jnp.float32, -bound, bound)
        return w, b

    keys = jax.random.split(key, 2 + NUM_LAYERS)
    p = {}
    p["w_in"], p["b_in"] = linear(keys[0], IN_FEATURES, EMBED_DIM)
    p["w_out"] = linear(keys[1], EMBED_DIM, OUT_FEATURES, bias=False)

    stacks = {n: [] for n in ["wq", "bq", "wk", "bk", "wv", "bv", "wo", "bo", "wff", "bff"]}
    for l in range(NUM_LAYERS):
        lk = jax.random.split(keys[2 + l], 5)
        for name, k, fi, fo in [("q", lk[0], EMBED_DIM, HD),
                                ("k", lk[1], EMBED_DIM, HD),
                                ("v", lk[2], EMBED_DIM, HD),
                                ("o", lk[3], HD, EMBED_DIM),
                                ("ff", lk[4], EMBED_DIM, EMBED_DIM)]:
            w, b = linear(k, fi, fo)
            stacks["w" + name].append(w)
            stacks["b" + name].append(b)
    for n, vals in stacks.items():
        p[n] = jnp.stack(vals)

    # LayerNorm params: PyTorch default init (gamma=1, beta=0)
    p["g1"] = jnp.ones((NUM_LAYERS, 1, EMBED_DIM), jnp.float32)
    p["be1"] = jnp.zeros((NUM_LAYERS, 1, EMBED_DIM), jnp.float32)
    p["g2"] = jnp.ones((NUM_LAYERS, 1, EMBED_DIM), jnp.float32)
    p["be2"] = jnp.zeros((NUM_LAYERS, 1, EMBED_DIM), jnp.float32)
    return p


# ----------------------------- pure-JAX reference -------------------------------
def reference_forward(x, p):
    def ln(h, g, b):
        m = h.mean(-1, keepdims=True)
        v = ((h - m) ** 2).mean(-1, keepdims=True)
        return (h - m) / jnp.sqrt(v + LN_EPS) * g + b

    mu = x.mean(0, keepdims=True)
    var = ((x - mu) ** 2).mean(0, keepdims=True)
    h = (x - mu) / jnp.sqrt(var + BN_EPS)
    h = jax.nn.relu(h @ p["w_in"] + p["b_in"])
    B = x.shape[0]
    for l in range(NUM_LAYERS):
        q = (h @ p["wq"][l] + p["bq"][l]).reshape(B, NUM_HEADS, HEADS_DIM)
        k = (h @ p["wk"][l] + p["bk"][l]).reshape(B, NUM_HEADS, HEADS_DIM)
        v = (h @ p["wv"][l] + p["bv"][l]).reshape(B, NUM_HEADS, HEADS_DIM)
        s = jnp.einsum("bhd,bgd->bhg", q, k) / math.sqrt(HEADS_DIM)
        a = jax.nn.softmax(s, axis=-1)
        o = jnp.einsum("bhg,bgd->bhd", a, v).reshape(B, NUM_HEADS * HEADS_DIM)
        o = o @ p["wo"][l] + p["bo"][l]
        h = ln(h + o, p["g1"][l], p["be1"][l])
        ff = jax.nn.relu(h @ p["wff"][l] + p["bff"][l])
        h = ln(h + ff, p["g2"][l], p["be2"][l])
    return h @ p["w_out"]


if __name__ == "__main__":
    key = jax.random.PRNGKey(0)
    kx, kp = jax.random.split(key)
    x = jax.random.normal(kx, (BATCH, IN_FEATURES), jnp.float32)
    params = init_params(kp)

    out = jax.block_until_ready(vector_transformer(x, params))
    ref = reference_forward(x, params)

    assert out.shape == (BATCH, OUT_FEATURES), out.shape
    assert jnp.allclose(out, ref, atol=1e-4, rtol=1e-4), (
        f"max abs err = {jnp.max(jnp.abs(out - ref))}")
    print("KERNEL_OK")
</pallas_src>

<mosaic_0001>
module attributes {stable_mosaic.version = 11 : i64} {
  func.func @vector_transformer_kernel(%arg0: memref<8x16xf32, #tpu.memory_space<vmem>>, %arg1: memref<16x32xf32, #tpu.memory_space<vmem>>, %arg2: memref<1x32xf32, #tpu.memory_space<vmem>>, %arg3: memref<2x32x384xf32, #tpu.memory_space<vmem>>, %arg4: memref<2x1x384xf32, #tpu.memory_space<vmem>>, %arg5: memref<2x128x32xf32, #tpu.memory_space<vmem>>, %arg6: memref<2x1x32xf32, #tpu.memory_space<vmem>>, %arg7: memref<2x1x32xf32, #tpu.memory_space<vmem>>, %arg8: memref<2x1x32xf32, #tpu.memory_space<vmem>>, %arg9: memref<2x32x32xf32, #tpu.memory_space<vmem>>, %arg10: memref<2x1x32xf32, #tpu.memory_space<vmem>>, %arg11: memref<2x1x32xf32, #tpu.memory_space<vmem>>, %arg12: memref<2x1x32xf32, #tpu.memory_space<vmem>>, %arg13: memref<128x16xf32, #tpu.memory_space<vmem>>, %arg14: memref<16x16xf32, #tpu.memory_space<vmem>>, %arg15: memref<16x128xf32, #tpu.memory_space<vmem>>, %arg16: memref<32x128xf32, #tpu.memory_space<vmem>>, %arg17: memref<8x128xf32, #tpu.memory_space<vmem>>) attributes {dimension_semantics = [], scalar_prefetch = 0 : i64, scratch_operands = 0 : i64, tpu.core_type = #tpu.core_type<tc>} {
    %c0 = arith.constant 0 : index
    %c0_0 = arith.constant 0 : index
    %0 = vector.load %arg0[%c0, %c0_0] : memref<8x16xf32, #tpu.memory_space<vmem>>, vector<8x16xf32>
    %cst = arith.constant dense<0.000000e+00> : vector<16xf32>
    %1 = vector.multi_reduction <add>, %0, %cst [0] : vector<8x16xf32> to vector<16xf32>
    %2 = vector.shape_cast %1 : vector<16xf32> to vector<1x16xf32>
    %cst_1 = arith.constant 8.000000e+00 : f32
    %3 = vector.broadcast %cst_1 : f32 to vector<1x16xf32>
    %4 = arith.divf %2, %3 : vector<1x16xf32>
    %5 = vector.broadcast %4 : vector<1x16xf32> to vector<8x16xf32>
    %6 = arith.subf %0, %5 : vector<8x16xf32>
    %7 = arith.mulf %6, %6 : vector<8x16xf32>
    %cst_2 = arith.constant dense<0.000000e+00> : vector<16xf32>
    %8 = vector.multi_reduction <add>, %7, %cst_2 [0] : vector<8x16xf32> to vector<16xf32>
    %9 = vector.shape_cast %8 : vector<16xf32> to vector<1x16xf32>
    %cst_3 = arith.constant 8.000000e+00 : f32
    %10 = vector.broadcast %cst_3 : f32 to vector<1x16xf32>
    %11 = arith.divf %9, %10 : vector<1x16xf32>
    %12 = vector.broadcast %4 : vector<1x16xf32> to vector<8x16xf32>
    %13 = arith.subf %0, %12 : vector<8x16xf32>
    %cst_4 = arith.constant 9.99999974E-6 : f32
    %14 = vector.broadcast %cst_4 : f32 to vector<1x16xf32>
    %15 = arith.addf %11, %14 : vector<1x16xf32>
    %16 = math.rsqrt %15 : vector<1x16xf32>
    %17 = vector.broadcast %16 : vector<1x16xf32> to vector<8x16xf32>
    %18 = arith.mulf %13, %17 : vector<8x16xf32>
    %c0_5 = arith.constant 0 : index
    %c0_6 = arith.constant 0 : index
    %19 = vector.load %arg1[%c0_5, %c0_6] : memref<16x32xf32, #tpu.memory_space<vmem>>, vector<16x32xf32>
    %cst_7 = arith.constant dense<0.000000e+00> : vector<8x32xf32>
    %20 = tpu.matmul %18, %19, %cst_7 {dimension_numbers = #tpu.dot_dimension_numbers<[1], [0], [0], [1], [0, 0, 1, 1], [], []>} : vector<8x16xf32>, vector<16x32xf32>, vector<8x32xf32> -> vector<8x32xf32>
    %c0_8 = arith.constant 0 : index
    %c0_9 = arith.constant 0 : index
    %21 = vector.load %arg2[%c0_8, %c0_9] : memref<1x32xf32, #tpu.memory_space<vmem>>, vector<1x32xf32>
    %22 = vector.broadcast %21 : vector<1x32xf32> to vector<8x32xf32>
    %23 = arith.addf %20, %22 : vector<8x32xf32>
    %cst_10 = arith.constant 0.000000e+00 : f32
    %24 = vector.broadcast %cst_10 : f32 to vector<8x32xf32>
    %25 = arith.maximumf %23, %24 : vector<8x32xf32>
    %c0_11 = arith.constant 0 : index
    %c0_12 = arith.constant 0 : index
    %26 = vector.load %arg13[%c0_11, %c0_12] : memref<128x16xf32, #tpu.memory_space<vmem>>, vector<128x16xf32>
    %c0_13 = arith.constant 0 : index
    %c0_14 = arith.constant 0 : index
    %27 = vector.load %arg14[%c0_13, %c0_14] : memref<16x16xf32, #tpu.memory_space<vmem>>, vector<16x16xf32>
    %c0_15 = arith.constant 0 : index
    %c0_16 = arith.constant 0 : index
    %28 = vector.load %arg15[%c0_15, %c0_16] : memref<16x128xf32, #tpu.memory_space<vmem>>, vector<16x128xf32>
    %c0_17 = arith.constant 0 : index
    %c0_18 = arith.constant 0 : index
    %c0_19 = arith.constant 0 : index
    %29 = vector.load %arg3[%c0_17, %c0_18, %c0_19] : memref<2x32x384xf32, #tpu.memory_space<vmem>>, vector<1x32x384xf32>
    %30 = vector.shape_cast %29 : vector<1x32x384xf32> to vector<32x384xf32>
    %cst_20 = arith.constant dense<0.000000e+00> : vector<8x384xf32>
    %31 = tpu.matmul %25, %30, %cst_20 {dimension_numbers = #tpu.dot_dimension_numbers<[1], [0], [0], [1], [0, 0, 1, 1], [], []>} : vector<8x32xf32>, vector<32x384xf32>, vector<8x384xf32> -> vector<8x384xf32>
    %c0_21 = arith.constant 0 : index
    %c0_22 = arith.constant 0 : index
    %c0_23 = arith.constant 0 : index
    %32 = vector.load %arg4[%c0_21, %c0_22, %c0_23] : memref<2x1x384xf32, #tpu.memory_space<vmem>>, vector<1x1x384xf32>
    %33 = vector.shape_cast %32 : vector<1x1x384xf32> to vector<1x384xf32>
    %34 = vector.broadcast %33 : vector<1x384xf32> to vector<8x384xf32>
    %35 = arith.addf %31, %34 : vector<8x384xf32>
    %36 = vector.extract_strided_slice %35 {offsets = [0, 0], sizes = [8, 128], strides = [1, 1]} : vector<8x384xf32> to vector<8x128xf32>
    %37 = vector.extract_strided_slice %35 {offsets = [0, 128], sizes = [8, 128], strides = [1, 1]} : vector<8x384xf32> to vector<8x128xf32>
    %38 = vector.extract_strided_slice %35 {offsets = [0, 256], sizes = [8, 128], strides = [1, 1]} : vector<8x384xf32> to vector<8x128xf32>
    %39 = arith.mulf %36, %37 : vector<8x128xf32>
    %cst_24 = arith.constant dense<0.000000e+00> : vector<8x16xf32>
    %40 = tpu.matmul %39, %26, %cst_24 {dimension_numbers = #tpu.dot_dimension_numbers<[1], [0], [0], [1], [0, 0, 1, 1], [], []>} : vector<8x128xf32>, vector<128x16xf32>, vector<8x16xf32> -> vector<8x16xf32>
    %cst_25 = arith.constant dense<0xFF800000> : vector<8xf32>
    %41 = vector.multi_reduction <maximumf>, %40, %cst_25 [1] : vector<8x16xf32> to vector<8xf32>
    %42 = vector.shape_cast %41 : vector<8xf32> to vector<8x1xf32>
    %43 = vector.broadcast %42 : vector<8x1xf32> to vector<8x16xf32>
    %44 = arith.subf %40, %43 : vector<8x16xf32>
    %45 = math.exp %44 : vector<8x16xf32>
    %cst_26 = arith.constant dense<0.000000e+00> : vector<8x16xf32>
    %46 = tpu.matmul %45, %27, %cst_26 {dimension_numbers = #tpu.dot_dimension_numbers<[1], [0], [0], [1], [0, 0, 1, 1], [], []>} : vector<8x16xf32>, vector<16x16xf32>, vector<8x16xf32> -> vector<8x16xf32>
    %47 = tpu.reciprocal %46 : vector<8x16xf32> -> vector<8x16xf32>
    %48 = arith.mulf %45, %47 : vector<8x16xf32>
    %cst_27 = arith.constant dense<0.000000e+00> : vector<8x128xf32>
    %49 = tpu.matmul %48, %28, %cst_27 {dimension_numbers = #tpu.dot_dimension_numbers<[1], [0], [0], [1], [0, 0, 1, 1], [], []>} : vector<8x16xf32>, vector<16x128xf32>, vector<8x128xf32> -> vector<8x128xf32>
    %50 = arith.mulf %49, %38 : vector<8x128xf32>
    %c0_28 = arith.constant 0 : index
    %c0_29 = arith.constant 0 : index
    %c0_30 = arith.constant 0 : index
    %51 = vector.load %arg5[%c0_28, %c0_29, %c0_30] : memref<2x128x32xf32, #tpu.memory_space<vmem>>, vector<1x128x32xf32>
    %52 = vector.shape_cast %51 : vector<1x128x32xf32> to vector<128x32xf32>
    %cst_31 = arith.constant dense<0.000000e+00> : vector<8x32xf32>
    %53 = tpu.matmul %50, %52, %cst_31 {dimension_numbers = #tpu.dot_dimension_numbers<[1], [0], [0], [1], [0, 0, 1, 1], [], []>} : vector<8x128xf32>, vector<128x32xf32>, vector<8x32xf32> -> vector<8x32xf32>
    %c0_32 = arith.constant 0 : index
    %c0_33 = arith.constant 0 : index
    %c0_34 = arith.constant 0 : index
    %54 = vector.load %arg6[%c0_32, %c0_33, %c0_34] : memref<2x1x32xf32, #tpu.memory_space<vmem>>, vector<1x1x32xf32>
    %55 = vector.shape_cast %54 : vector<1x1x32xf32> to vector<1x32xf32>
    %56 = vector.broadcast %55 : vector<1x32xf32> to vector<8x32xf32>
    %57 = arith.addf %53, %56 : vector<8x32xf32>
    %58 = arith.addf %25, %57 : vector<8x32xf32>
    %c0_35 = arith.constant 0 : index
    %c0_36 = arith.constant 0 : index
    %c0_37 = arith.constant 0 : index
    %59 = vector.load %arg7[%c0_35, %c0_36, %c0_37] : memref<2x1x32xf32, #tpu.memory_space<vmem>>, vector<1x1x32xf32>
    %60 = vector.shape_cast %59 : vector<1x1x32xf32> to vector<1x32xf32>
    %c0_38 = arith.constant 0 : index
    %c0_39 = arith.constant 0 : index
    %c0_40 = arith.constant 0 : index
    %61 = vector.load %arg8[%c0_38, %c0_39, %c0_40] : memref<2x1x32xf32, #tpu.memory_space<vmem>>, vector<1x1x32xf32>
    %62 = vector.shape_cast %61 : vector<1x1x32xf32> to vector<1x32xf32>
    %cst_41 = arith.constant dense<0.000000e+00> : vector<8xf32>
    %63 = vector.multi_reduction <add>, %58, %cst_41 [1] : vector<8x32xf32> to vector<8xf32>
    %64 = vector.shape_cast %63 : vector<8xf32> to vector<8x1xf32>
    %cst_42 = arith.constant 3.200000e+01 : f32
    %65 = vector.broadcast %cst_42 : f32 to vector<8x1xf32>
    %66 = arith.divf %64, %65 : vector<8x1xf32>
    %67 = vector.broadcast %66 : vector<8x1xf32> to vector<8x32xf32>
    %68 = arith.subf %58, %67 : vector<8x32xf32>
    %69 = arith.mulf %68, %68 : vector<8x32xf32>
    %cst_43 = arith.constant dense<0.000000e+00> : vector<8xf32>
    %70 = vector.multi_reduction <add>, %69, %cst_43 [1] : vector<8x32xf32> to vector<8xf32>
    %71 = vector.shape_cast %70 : vector<8xf32> to vector<8x1xf32>
    %cst_44 = arith.constant 3.200000e+01 : f32
    %72 = vector.broadcast %cst_44 : f32 to vector<8x1xf32>
    %73 = arith.divf %71, %72 : vector<8x1xf32>
    %74 = vector.broadcast %66 : vector<8x1xf32> to vector<8x32xf32>
    %75 = arith.subf %58, %74 : vector<8x32xf32>
    %cst_45 = arith.constant 9.99999974E-6 : f32
    %76 = vector.broadcast %cst_45 : f32 to vector<8x1xf32>
    %77 = arith.addf %73, %76 : vector<8x1xf32>
    %78 = math.rsqrt %77 : vector<8x1xf32>
    %79 = vector.broadcast %78 : vector<8x1xf32> to vector<8x32xf32>
    %80 = arith.mulf %75, %79 : vector<8x32xf32>
    %81 = vector.broadcast %60 : vector<1x32xf32> to vector<8x32xf32>
    %82 = arith.mulf %80, %81 : vector<8x32xf32>
    %83 = vector.broadcast %62 : vector<1x32xf32> to vector<8x32xf32>
    %84 = arith.addf %82, %83 : vector<8x32xf32>
    %c0_46 = arith.constant 0 : index
    %c0_47 = arith.constant 0 : index
    %c0_48 = arith.constant 0 : index
    %85 = vector.load %arg9[%c0_46, %c0_47, %c0_48] : memref<2x32x32xf32, #tpu.memory_space<vmem>>, vector<1x32x32xf32>
    %86 = vector.shape_cast %85 : vector<1x32x32xf32> to vector<32x32xf32>
    %cst_49 = arith.constant dense<0.000000e+00> : vector<8x32xf32>
    %87 = tpu.matmul %84, %86, %cst_49 {dimension_numbers = #tpu.dot_dimension_numbers<[1], [0], [0], [1], [0, 0, 1, 1], [], []>} : vector<8x32xf32>, vector<32x32xf32>, vector<8x32xf32> -> vector<8x32xf32>
    %c0_50 = arith.constant 0 : index
    %c0_51 = arith.constant 0 : index
    %c0_52 = arith.constant 0 : index
    %88 = vector.load %arg10[%c0_50, %c0_51, %c0_52] : memref<2x1x32xf32, #tpu.memory_space<vmem>>, vector<1x1x32xf32>
    %89 = vector.shape_cast %88 : vector<1x1x32xf32> to vector<1x32xf32>
    %90 = vector.broadcast %89 : vector<1x32xf32> to vector<8x32xf32>
    %91 = arith.addf %87, %90 : vector<8x32xf32>
    %cst_53 = arith.constant 0.000000e+00 : f32
    %92 = vector.broadcast %cst_53 : f32 to vector<8x32xf32>
    %93 = arith.maximumf %91, %92 : vector<8x32xf32>
    %94 = arith.addf %84, %93 : vector<8x32xf32>
    %c0_54 = arith.constant 0 : index
    %c0_55 = arith.constant 0 : index
    %c0_56 = arith.constant 0 : index
    %95 = vector.load %arg11[%c0_54, %c0_55, %c0_56] : memref<2x1x32xf32, #tpu.memory_space<vmem>>, vector<1x1x32xf32>
    %96 = vector.shape_cast %95 : vector<1x1x32xf32> to vector<1x32xf32>
    %c0_57 = arith.constant 0 : index
    %c0_58 = arith.constant 0 : index
    %c0_59 = arith.constant 0 : index
    %97 = vector.load %arg12[%c0_57, %c0_58, %c0_59] : memref<2x1x32xf32, #tpu.memory_space<vmem>>, vector<1x1x32xf32>
    %98 = vector.shape_cast %97 : vector<1x1x32xf32> to vector<1x32xf32>
    %cst_60 = arith.constant dense<0.000000e+00> : vector<8xf32>
    %99 = vector.multi_reduction <add>, %94, %cst_60 [1] : vector<8x32xf32> to vector<8xf32>
    %100 = vector.shape_cast %99 : vector<8xf32> to vector<8x1xf32>
    %cst_61 = arith.constant 3.200000e+01 : f32
    %101 = vector.broadcast %cst_61 : f32 to vector<8x1xf32>
    %102 = arith.divf %100, %101 : vector<8x1xf32>
    %103 = vector.broadcast %102 : vector<8x1xf32> to vector<8x32xf32>
    %104 = arith.subf %94, %103 : vector<8x32xf32>
    %105 = arith.mulf %104, %104 : vector<8x32xf32>
    %cst_62 = arith.constant dense<0.000000e+00> : vector<8xf32>
    %106 = vector.multi_reduction <add>, %105, %cst_62 [1] : vector<8x32xf32> to vector<8xf32>
    %107 = vector.shape_cast %106 : vector<8xf32> to vector<8x1xf32>
    %cst_63 = arith.constant 3.200000e+01 : f32
    %108 = vector.broadcast %cst_63 : f32 to vector<8x1xf32>
    %109 = arith.divf %107, %108 : vector<8x1xf32>
    %110 = vector.broadcast %102 : vector<8x1xf32> to vector<8x32xf32>
    %111 = arith.subf %94, %110 : vector<8x32xf32>
    %cst_64 = arith.constant 9.99999974E-6 : f32
    %112 = vector.broadcast %cst_64 : f32 to vector<8x1xf32>
    %113 = arith.addf %109, %112 : vector<8x1xf32>
    %114 = math.rsqrt %113 : vector<8x1xf32>
    %115 = vector.broadcast %114 : vector<8x1xf32> to vector<8x32xf32>
    %116 = arith.mulf %111, %115 : vector<8x32xf32>
    %117 = vector.broadcast %96 : vector<1x32xf32> to vector<8x32xf32>
    %118 = arith.mulf %116, %117 : vector<8x32xf32>
    %119 = vector.broadcast %98 : vector<1x32xf32> to vector<8x32xf32>
    %120 = arith.addf %118, %119 : vector<8x32xf32>
    %c1 = arith.constant 1 : index
    %c0_65 = arith.constant 0 : index
    %c0_66 = arith.constant 0 : index
    %121 = vector.load %arg3[%c1, %c0_65, %c0_66] : memref<2x32x384xf32, #tpu.memory_space<vmem>>, vector<1x32x384xf32>
    %122 = vector.shape_cast %121 : vector<1x32x384xf32> to vector<32x384xf32>
    %cst_67 = arith.constant dense<0.000000e+00> : vector<8x384xf32>
    %123 = tpu.matmul %120, %122, %cst_67 {dimension_numbers = #tpu.dot_dimension_numbers<[1], [0], [0], [1], [0, 0, 1, 1], [], []>} : vector<8x32xf32>, vector<32x384xf32>, vector<8x384xf32> -> vector<8x384xf32>
    %c1_68 = arith.constant 1 : index
    %c0_69 = arith.constant 0 : index
    %c0_70 = arith.constant 0 : index
    %124 = vector.load %arg4[%c1_68, %c0_69, %c0_70] : memref<2x1x384xf32, #tpu.memory_space<vmem>>, vector<1x1x384xf32>
    %125 = vector.shape_cast %124 : vector<1x1x384xf32> to vector<1x384xf32>
    %126 = vector.broadcast %125 : vector<1x384xf32> to vector<8x384xf32>
    %127 = arith.addf %123, %126 : vector<8x384xf32>
    %128 = vector.extract_strided_slice %127 {offsets = [0, 0], sizes = [8, 128], strides = [1, 1]} : vector<8x384xf32> to vector<8x128xf32>
    %129 = vector.extract_strided_slice %127 {offsets = [0, 128], sizes = [8, 128], strides = [1, 1]} : vector<8x384xf32> to vector<8x128xf32>
    %130 = vector.extract_strided_slice %127 {offsets = [0, 256], sizes = [8, 128], strides = [1, 1]} : vector<8x384xf32> to vector<8x128xf32>
    %131 = arith.mulf %128, %129 : vector<8x128xf32>
    %cst_71 = arith.constant dense<0.000000e+00> : vector<8x16xf32>
    %132 = tpu.matmul %131, %26, %cst_71 {dimension_numbers = #tpu.dot_dimension_numbers<[1], [0], [0], [1], [0, 0, 1, 1], [], []>} : vector<8x128xf32>, vector<128x16xf32>, vector<8x16xf32> -> vector<8x16xf32>
    %cst_72 = arith.constant dense<0xFF800000> : vector<8xf32>
    %133 = vector.multi_reduction <maximumf>, %132, %cst_72 [1] : vector<8x16xf32> to vector<8xf32>
    %134 = vector.shape_cast %133 : vector<8xf32> to vector<8x1xf32>
    %135 = vector.broadcast %134 : vector<8x1xf32> to vector<8x16xf32>
    %136 = arith.subf %132, %135 : vector<8x16xf32>
    %137 = math.exp %136 : vector<8x16xf32>
    %cst_73 = arith.constant dense<0.000000e+00> : vector<8x16xf32>
    %138 = tpu.matmul %137, %27, %cst_73 {dimension_numbers = #tpu.dot_dimension_numbers<[1], [0], [0], [1], [0, 0, 1, 1], [], []>} : vector<8x16xf32>, vector<16x16xf32>, vector<8x16xf32> -> vector<8x16xf32>
    %139 = tpu.reciprocal %138 : vector<8x16xf32> -> vector<8x16xf32>
    %140 = arith.mulf %137, %139 : vector<8x16xf32>
    %cst_74 = arith.constant dense<0.000000e+00> : vector<8x128xf32>
    %141 = tpu.matmul %140, %28, %cst_74 {dimension_numbers = #tpu.dot_dimension_numbers<[1], [0], [0], [1], [0, 0, 1, 1], [], []>} : vector<8x16xf32>, vector<16x128xf32>, vector<8x128xf32> -> vector<8x128xf32>
    %142 = arith.mulf %141, %130 : vector<8x128xf32>
    %c1_75 = arith.constant 1 : index
    %c0_76 = arith.constant 0 : index
    %c0_77 = arith.constant 0 : index
    %143 = vector.load %arg5[%c1_75, %c0_76, %c0_77] : memref<2x128x32xf32, #tpu.memory_space<vmem>>, vector<1x128x32xf32>
    %144 = vector.shape_cast %143 : vector<1x128x32xf32> to vector<128x32xf32>
    %cst_78 = arith.constant dense<0.000000e+00> : vector<8x32xf32>
    %145 = tpu.matmul %142, %144, %cst_78 {dimension_numbers = #tpu.dot_dimension_numbers<[1], [0], [0], [1], [0, 0, 1, 1], [], []>} : vector<8x128xf32>, vector<128x32xf32>, vector<8x32xf32> -> vector<8x32xf32>
    %c1_79 = arith.constant 1 : index
    %c0_80 = arith.constant 0 : index
    %c0_81 = arith.constant 0 : index
    %146 = vector.load %arg6[%c1_79, %c0_80, %c0_81] : memref<2x1x32xf32, #tpu.memory_space<vmem>>, vector<1x1x32xf32>
    %147 = vector.shape_cast %146 : vector<1x1x32xf32> to vector<1x32xf32>
    %148 = vector.broadcast %147 : vector<1x32xf32> to vector<8x32xf32>
    %149 = arith.addf %145, %148 : vector<8x32xf32>
    %150 = arith.addf %120, %149 : vector<8x32xf32>
    %c1_82 = arith.constant 1 : index
    %c0_83 = arith.constant 0 : index
    %c0_84 = arith.constant 0 : index
    %151 = vector.load %arg7[%c1_82, %c0_83, %c0_84] : memref<2x1x32xf32, #tpu.memory_space<vmem>>, vector<1x1x32xf32>
    %152 = vector.shape_cast %151 : vector<1x1x32xf32> to vector<1x32xf32>
    %c1_85 = arith.constant 1 : index
    %c0_86 = arith.constant 0 : index
    %c0_87 = arith.constant 0 : index
    %153 = vector.load %arg8[%c1_85, %c0_86, %c0_87] : memref<2x1x32xf32, #tpu.memory_space<vmem>>, vector<1x1x32xf32>
    %154 = vector.shape_cast %153 : vector<1x1x32xf32> to vector<1x32xf32>
    %cst_88 = arith.constant dense<0.000000e+00> : vector<8xf32>
    %155 = vector.multi_reduction <add>, %150, %cst_88 [1] : vector<8x32xf32> to vector<8xf32>
    %156 = vector.shape_cast %155 : vector<8xf32> to vector<8x1xf32>
    %cst_89 = arith.constant 3.200000e+01 : f32
    %157 = vector.broadcast %cst_89 : f32 to vector<8x1xf32>
    %158 = arith.divf %156, %157 : vector<8x1xf32>
    %159 = vector.broadcast %158 : vector<8x1xf32> to vector<8x32xf32>
    %160 = arith.subf %150, %159 : vector<8x32xf32>
    %161 = arith.mulf %160, %160 : vector<8x32xf32>
    %cst_90 = arith.constant dense<0.000000e+00> : vector<8xf32>
    %162 = vector.multi_reduction <add>, %161, %cst_90 [1] : vector<8x32xf32> to vector<8xf32>
    %163 = vector.shape_cast %162 : vector<8xf32> to vector<8x1xf32>
    %cst_91 = arith.constant 3.200000e+01 : f32
    %164 = vector.broadcast %cst_91 : f32 to vector<8x1xf32>
    %165 = arith.divf %163, %164 : vector<8x1xf32>
    %166 = vector.broadcast %158 : vector<8x1xf32> to vector<8x32xf32>
    %167 = arith.subf %150, %166 : vector<8x32xf32>
    %cst_92 = arith.constant 9.99999974E-6 : f32
    %168 = vector.broadcast %cst_92 : f32 to vector<8x1xf32>
    %169 = arith.addf %165, %168 : vector<8x1xf32>
    %170 = math.rsqrt %169 : vector<8x1xf32>
    %171 = vector.broadcast %170 : vector<8x1xf32> to vector<8x32xf32>
    %172 = arith.mulf %167, %171 : vector<8x32xf32>
    %173 = vector.broadcast %152 : vector<1x32xf32> to vector<8x32xf32>
    %174 = arith.mulf %172, %173 : vector<8x32xf32>
    %175 = vector.broadcast %154 : vector<1x32xf32> to vector<8x32xf32>
    %176 = arith.addf %174, %175 : vector<8x32xf32>
    %c1_93 = arith.constant 1 : index
    %c0_94 = arith.constant 0 : index
    %c0_95 = arith.constant 0 : index
    %177 = vector.load %arg9[%c1_93, %c0_94, %c0_95] : memref<2x32x32xf32, #tpu.memory_space<vmem>>, vector<1x32x32xf32>
    %178 = vector.shape_cast %177 : vector<1x32x32xf32> to vector<32x32xf32>
    %cst_96 = arith.constant dense<0.000000e+00> : vector<8x32xf32>
    %179 = tpu.matmul %176, %178, %cst_96 {dimension_numbers = #tpu.dot_dimension_numbers<[1], [0], [0], [1], [0, 0, 1, 1], [], []>} : vector<8x32xf32>, vector<32x32xf32>, vector<8x32xf32> -> vector<8x32xf32>
    %c1_97 = arith.constant 1 : index
    %c0_98 = arith.constant 0 : index
    %c0_99 = arith.constant 0 : index
    %180 = vector.load %arg10[%c1_97, %c0_98, %c0_99] : memref<2x1x32xf32, #tpu.memory_space<vmem>>, vector<1x1x32xf32>
    %181 = vector.shape_cast %180 : vector<1x1x32xf32> to vector<1x32xf32>
    %182 = vector.broadcast %181 : vector<1x32xf32> to vector<8x32xf32>
    %183 = arith.addf %179, %182 : vector<8x32xf32>
    %cst_100 = arith.constant 0.000000e+00 : f32
    %184 = vector.broadcast %cst_100 : f32 to vector<8x32xf32>
    %185 = arith.maximumf %183, %184 : vector<8x32xf32>
    %186 = arith.addf %176, %185 : vector<8x32xf32>
    %c1_101 = arith.constant 1 : index
    %c0_102 = arith.constant 0 : index
    %c0_103 = arith.constant 0 : index
    %187 = vector.load %arg11[%c1_101, %c0_102, %c0_103] : memref<2x1x32xf32, #tpu.memory_space<vmem>>, vector<1x1x32xf32>
    %188 = vector.shape_cast %187 : vector<1x1x32xf32> to vector<1x32xf32>
    %c1_104 = arith.constant 1 : index
    %c0_105 = arith.constant 0 : index
    %c0_106 = arith.constant 0 : index
    %189 = vector.load %arg12[%c1_104, %c0_105, %c0_106] : memref<2x1x32xf32, #tpu.memory_space<vmem>>, vector<1x1x32xf32>
    %190 = vector.shape_cast %189 : vector<1x1x32xf32> to vector<1x32xf32>
    %cst_107 = arith.constant dense<0.000000e+00> : vector<8xf32>
    %191 = vector.multi_reduction <add>, %186, %cst_107 [1] : vector<8x32xf32> to vector<8xf32>
    %192 = vector.shape_cast %191 : vector<8xf32> to vector<8x1xf32>
    %cst_108 = arith.constant 3.200000e+01 : f32
    %193 = vector.broadcast %cst_108 : f32 to vector<8x1xf32>
    %194 = arith.divf %192, %193 : vector<8x1xf32>
    %195 = vector.broadcast %194 : vector<8x1xf32> to vector<8x32xf32>
    %196 = arith.subf %186, %195 : vector<8x32xf32>
    %197 = arith.mulf %196, %196 : vector<8x32xf32>
    %cst_109 = arith.constant dense<0.000000e+00> : vector<8xf32>
    %198 = vector.multi_reduction <add>, %197, %cst_109 [1] : vector<8x32xf32> to vector<8xf32>
    %199 = vector.shape_cast %198 : vector<8xf32> to vector<8x1xf32>
    %cst_110 = arith.constant 3.200000e+01 : f32
    %200 = vector.broadcast %cst_110 : f32 to vector<8x1xf32>
    %201 = arith.divf %199, %200 : vector<8x1xf32>
    %202 = vector.broadcast %194 : vector<8x1xf32> to vector<8x32xf32>
    %203 = arith.subf %186, %202 : vector<8x32xf32>
    %cst_111 = arith.constant 9.99999974E-6 : f32
    %204 = vector.broadcast %cst_111 : f32 to vector<8x1xf32>
    %205 = arith.addf %201, %204 : vector<8x1xf32>
    %206 = math.rsqrt %205 : vector<8x1xf32>
    %207 = vector.broadcast %206 : vector<8x1xf32> to vector<8x32xf32>
    %208 = arith.mulf %203, %207 : vector<8x32xf32>
    %209 = vector.broadcast %188 : vector<1x32xf32> to vector<8x32xf32>
    %210 = arith.mulf %208, %209 : vector<8x32xf32>
    %211 = vector.broadcast %190 : vector<1x32xf32> to vector<8x32xf32>
    %212 = arith.addf %210, %211 : vector<8x32xf32>
    %c0_112 = arith.constant 0 : index
    %c0_113 = arith.constant 0 : index
    %213 = vector.load %arg16[%c0_112, %c0_113] : memref<32x128xf32, #tpu.memory_space<vmem>>, vector<32x128xf32>
    %cst_114 = arith.constant dense<0.000000e+00> : vector<8x128xf32>
    %214 = tpu.matmul %212, %213, %cst_114 {dimension_numbers = #tpu.dot_dimension_numbers<[1], [0], [0], [1], [0, 0, 1, 1], [], []>} : vector<8x32xf32>, vector<32x128xf32>, vector<8x128xf32> -> vector<8x128xf32>
    %c0_115 = arith.constant 0 : index
    %c0_116 = arith.constant 0 : index
    %215 = vector.load %arg17[%c0_115, %c0_116] : memref<8x128xf32, #tpu.memory_space<vmem>>, vector<8x128xf32>
    tpu.vector_store %arg17[%c0_115, %c0_116], %214 {strides = array<i32>} : memref<8x128xf32, #tpu.memory_space<vmem>>, vector<8x128xf32>,
    return
  }
}

</mosaic_0001>

<llo_original>
// kernel: tile.29
$region0: #{tile.29}
  %s0 = inlined_call_operand.vmem [shape: f32[2,32,4,32], index: 0, kind: input, shape index: {}]
  %s1 = inlined_call_operand.vmem [shape: f32[2,32,128], index: 1, kind: output, shape index: {}]
  $region1: #{tile.29} parent=0
    #allocation0 [shape = 'u8[262144]{0}', space=vmem, size = 0x40000, scoped, tag = 'scoped mem for input reshape']
    %s3 = sshllo.u32 0, 4
    %s4 = smul.addr 4, 63
    %s5 = scalar_lea.vmem %s0, %s4
    %v6 = vld [vmem:[%s5] sm:%s3]
    %s7 = scalar_lea.vmem [#allocation0], 504
    %8 = vst [vmem:[%s7] sm:%s3] %v6
    %s9 = smul.addr 4, 62
    %s10 = scalar_lea.vmem %s0, %s9
    %v11 = vld [vmem:[%s10] sm:%s3]
    %s12 = scalar_lea.vmem [#allocation0], 496
    %13 = vst [vmem:[%s12] sm:%s3] %v11
    %s14 = smul.addr 4, 61
    %s15 = scalar_lea.vmem %s0, %s14
    %v16 = vld [vmem:[%s15] sm:%s3]
    %s17 = scalar_lea.vmem [#allocation0], 488
    %18 = vst [vmem:[%s17] sm:%s3] %v16
    %s19 = smul.addr 4, 60
    %s20 = scalar_lea.vmem %s0, %s19
    %v21 = vld [vmem:[%s20] sm:%s3]
    %s22 = scalar_lea.vmem [#allocation0], 480
    %23 = vst [vmem:[%s22] sm:%s3] %v21
    %s24 = smul.addr 4, 59
    %s25 = scalar_lea.vmem %s0, %s24
    %v26 = vld [vmem:[%s25] sm:%s3]
    %s27 = scalar_lea.vmem [#allocation0], 472
    %28 = vst [vmem:[%s27] sm:%s3] %v26
    %s29 = smul.addr 4, 58
    %s30 = scalar_lea.vmem %s0, %s29
    %v31 = vld [vmem:[%s30] sm:%s3]
    %s32 = scalar_lea.vmem [#allocation0], 464
    %33 = vst [vmem:[%s32] sm:%s3] %v31
    %s34 = smul.addr 4, 57
    %s35 = scalar_lea.vmem %s0, %s34
    %v36 = vld [vmem:[%s35] sm:%s3]
    %s37 = scalar_lea.vmem [#allocation0], 456
    %38 = vst [vmem:[%s37] sm:%s3] %v36
    %s39 = smul.addr 4, 56
    %s40 = scalar_lea.vmem %s0, %s39
    %v41 = vld [vmem:[%s40] sm:%s3]
    %s42 = scalar_lea.vmem [#allocation0], 448
    %43 = vst [vmem:[%s42] sm:%s3] %v41
    %s44 = smul.addr 4, 55
    %s45 = scalar_lea.vmem %s0, %s44
    %v46 = vld [vmem:[%s45] sm:%s3]
    %s47 = scalar_lea.vmem [#allocation0], 440
    %48 = vst [vmem:[%s47] sm:%s3] %v46
    %s49 = smul.addr 4, 54
    %s50 = scalar_lea.vmem %s0, %s49
    %v51 = vld [vmem:[%s50] sm:%s3]
    %s52 = scalar_lea.vmem [#allocation0], 432
    %53 = vst [vmem:[%s52] sm:%s3] %v51
    %s54 = smul.addr 4, 53
    %s55 = scalar_lea.vmem %s0, %s54
    %v56 = vld [vmem:[%s55] sm:%s3]
    %s57 = scalar_lea.vmem [#allocation0], 424
    %58 = vst [vmem:[%s57] sm:%s3] %v56
    %s59 = smul.addr 4, 52
    %s60 = scalar_lea.vmem %s0, %s59
    %v61 = vld [vmem:[%s60] sm:%s3]
    %s62 = scalar_lea.vmem [#allocation0], 416
    %63 = vst [vmem:[%s62] sm:%s3] %v61
    %s64 = smul.addr 4, 51
    %s65 = scalar_lea.vmem %s0, %s64
    %v66 = vld [vmem:[%s65] sm:%s3]
    %s67 = scalar_lea.vmem [#allocation0], 408
    %68 = vst [vmem:[%s67] sm:%s3] %v66
    %s69 = smul.addr 4, 50
    %s70 = scalar_lea.vmem %s0, %s69
    %v71 = vld [vmem:[%s70] sm:%s3]
    %s72 = scalar_lea.vmem [#allocation0], 400
    %73 = vst [vmem:[%s72] sm:%s3] %v71
    %s74 = smul.addr 4, 49
    %s75 = scalar_lea.vmem %s0, %s74
    %v76 = vld [vmem:[%s75] sm:%s3]
    %s77 = scalar_lea.vmem [#allocation0], 392
    %78 = vst [vmem:[%s77] sm:%s3] %v76
    %s79 = smul.addr 4, 48
    %s80 = scalar_lea.vmem %s0, %s79
    %v81 = vld [vmem:[%s80] sm:%s3]
    %s82 = scalar_lea.vmem [#allocation0], 384
    %83 = vst [vmem:[%s82] sm:%s3] %v81
    %s84 = smul.addr 4, 47
    %s85 = scalar_lea.vmem %s0, %s84
    %v86 = vld [vmem:[%s85] sm:%s3]
    %s87 = scalar_lea.vmem [#allocation0], 376
    %88 = vst [vmem:[%s87] sm:%s3] %v86
    %s89 = smul.addr 4, 46
    %s90 = scalar_lea.vmem %s0, %s89
    %v91 = vld [vmem:[%s90] sm:%s3]
    %s92 = scalar_lea.vmem [#allocation0], 368
    %93 = vst [vmem:[%s92] sm:%s3] %v91
    %s94 = smul.addr 4, 45
    %s95 = scalar_lea.vmem %s0, %s94
    %v96 = vld [vmem:[%s95] sm:%s3]
    %s97 = scalar_lea.vmem [#allocation0], 360
    %98 = vst [vmem:[%s97] sm:%s3] %v96
    %s99 = smul.addr 4, 44
    %s100 = scalar_lea.vmem %s0, %s99
    %v101 = vld [vmem:[%s100] sm:%s3]
    %s102 = scalar_lea.vmem [#allocation0], 352
    %103 = vst [vmem:[%s102] sm:%s3] %v101
    %s104 = smul.addr 4, 43
    %s105 = scalar_lea.vmem %s0, %s104
    %v106 = vld [vmem:[%s105] sm:%s3]
    %s107 = scalar_lea.vmem [#allocation0], 344
    %108 = vst [vmem:[%s107] sm:%s3] %v106
    %s109 = smul.addr 4, 42
    %s110 = scalar_lea.vmem %s0, %s109
    %v111 = vld [vmem:[%s110] sm:%s3]
    %s112 = scalar_lea.vmem [#allocation0], 336
    %113 = vst [vmem:[%s112] sm:%s3] %v111
    %s114 = smul.addr 4, 41
    %s115 = scalar_lea.vmem %s0, %s114
    %v116 = vld [vmem:[%s115] sm:%s3]
    %s117 = scalar_lea.vmem [#allocation0], 328
    %118 = vst [vmem:[%s117] sm:%s3] %v116
    %s119 = smul.addr 4, 40
    %s120 = scalar_lea.vmem %s0, %s119
    %v121 = vld [vmem:[%s120] sm:%s3]
    %s122 = scalar_lea.vmem [#allocation0], 320
    %123 = vst [vmem:[%s122] sm:%s3] %v121
    %s124 = smul.addr 4, 39
    %s125 = scalar_lea.vmem %s0, %s124
    %v126 = vld [vmem:[%s125] sm:%s3]
    %s127 = scalar_lea.vmem [#allocation0], 312
    %128 = vst [vmem:[%s127] sm:%s3] %v126
    %s129 = smul.addr 4, 38
    %s130 = scalar_lea.vmem %s0, %s129
    %v131 = vld [vmem:[%s130] sm:%s3]
    %s132 = scalar_lea.vmem [#allocation0], 304
    %133 = vst [vmem:[%s132] sm:%s3] %v131
    %s134 = smul.addr 4, 37
    %s135 = scalar_lea.vmem %s0, %s134
    %v136 = vld [vmem:[%s135] sm:%s3]
    %s137 = scalar_lea.vmem [#allocation0], 296
    %138 = vst [vmem:[%s137] sm:%s3] %v136
    %s139 = smul.addr 4, 36
    %s140 = scalar_lea.vmem %s0, %s139
    %v141 = vld [vmem:[%s140] sm:%s3]
    %s142 = scalar_lea.vmem [#allocation0], 288
    %143 = vst [vmem:[%s142] sm:%s3] %v141
    %s144 = smul.addr 4, 35
    %s145 = scalar_lea.vmem %s0, %s144
    %v146 = vld [vmem:[%s145] sm:%s3]
    %s147 = scalar_lea.vmem [#allocation0], 280
    %148 = vst [vmem:[%s147] sm:%s3] %v146
    %s149 = smul.addr 4, 34
    %s150 = scalar_lea.vmem %s0, %s149
    %v151 = vld [vmem:[%s150] sm:%s3]
    %s152 = scalar_lea.vmem [#allocation0], 272
    %153 = vst [vmem:[%s152] sm:%s3] %v151
    %s154 = smul.addr 4, 33
    %s155 = scalar_lea.vmem %s0, %s154
    %v156 = vld [vmem:[%s155] sm:%s3]
    %s157 = scalar_lea.vmem [#allocation0], 264
    %158 = vst [vmem:[%s157] sm:%s3] %v156
    %s159 = smul.addr 4, 32
    %s160 = scalar_lea.vmem %s0, %s159
    %v161 = vld [vmem:[%s160] sm:%s3]
    %s162 = scalar_lea.vmem [#allocation0], 256
    %163 = vst [vmem:[%s162] sm:%s3] %v161
    %s164 = smul.addr 4, 31
    %s165 = scalar_lea.vmem %s0, %s164
    %v166 = vld [vmem:[%s165] sm:%s3]
    %s167 = scalar_lea.vmem [#allocation0], 248
    %168 = vst [vmem:[%s167] sm:%s3] %v166
    %s169 = smul.addr 4, 30
    %s170 = scalar_lea.vmem %s0, %s169
    %v171 = vld [vmem:[%s170] sm:%s3]
    %s172 = scalar_lea.vmem [#allocation0], 240
    %173 = vst [vmem:[%s172] sm:%s3] %v171
    %s174 = smul.addr 4, 29
    %s175 = scalar_lea.vmem %s0, %s174
    %v176 = vld [vmem:[%s175] sm:%s3]
    %s177 = scalar_lea.vmem [#allocation0], 232
    %178 = vst [vmem:[%s177] sm:%s3] %v176
    %s179 = smul.addr 4, 28
    %s180 = scalar_lea.vmem %s0, %s179
    %v181 = vld [vmem:[%s180] sm:%s3]
    %s182 = scalar_lea.vmem [#allocation0], 224
    %183 = vst [vmem:[%s182] sm:%s3] %v181
    %s184 = smul.addr 4, 27
    %s185 = scalar_lea.vmem %s0, %s184
    %v186 = vld [vmem:[%s185] sm:%s3]
    %s187 = scalar_lea.vmem [#allocation0], 216
    %188 = vst [vmem:[%s187] sm:%s3] %v186
    %s189 = smul.addr 4, 26
    %s190 = scalar_lea.vmem %s0, %s189
    %v191 = vld [vmem:[%s190] sm:%s3]
    %s192 = scalar_lea.vmem [#allocation0], 208
    %193 = vst [vmem:[%s192] sm:%s3] %v191
    %s194 = smul.addr 4, 25
    %s195 = scalar_lea.vmem %s0, %s194
    %v196 = vld [vmem:[%s195] sm:%s3]
    %s197 = scalar_lea.vmem [#allocation0], 200
    %198 = vst [vmem:[%s197] sm:%s3] %v196
    %s199 = smul.addr 4, 24
    %s200 = scalar_lea.vmem %s0, %s199
    %v201 = vld [vmem:[%s200] sm:%s3]
    %s202 = scalar_lea.vmem [#allocation0], 192
    %203 = vst [vmem:[%s202] sm:%s3] %v201
    %s204 = smul.addr 4, 23
    %s205 = scalar_lea.vmem %s0, %s204
    %v206 = vld [vmem:[%s205] sm:%s3]
    %s207 = scalar_lea.vmem [#allocation0], 184
    %208 = vst [vmem:[%s207] sm:%s3] %v206
    %s209 = smul.addr 4, 22
    %s210 = scalar_lea.vmem %s0, %s209
    %v211 = vld [vmem:[%s210] sm:%s3]
    %s212 = scalar_lea.vmem [#allocation0], 176
    %213 = vst [vmem:[%s212] sm:%s3] %v211
    %s214 = smul.addr 4, 21
    %s215 = scalar_lea.vmem %s0, %s214
    %v216 = vld [vmem:[%s215] sm:%s3]
    %s217 = scalar_lea.vmem [#allocation0], 168
    %218 = vst [vmem:[%s217] sm:%s3] %v216
    %s219 = smul.addr 4, 20
    %s220 = scalar_lea.vmem %s0, %s219
    %v221 = vld [vmem:[%s220] sm:%s3]
    %s222 = scalar_lea.vmem [#allocation0], 160
    %223 = vst [vmem:[%s222] sm:%s3] %v221
    %s224 = smul.addr 4, 19
    %s225 = scalar_lea.vmem %s0, %s224
    %v226 = vld [vmem:[%s225] sm:%s3]
    %s227 = scalar_lea.vmem [#allocation0], 152
    %228 = vst [vmem:[%s227] sm:%s3] %v226
    %s229 = smul.addr 4, 18
    %s230 = scalar_lea.vmem %s0, %s229
    %v231 = vld [vmem:[%s230] sm:%s3]
    %s232 = scalar_lea.vmem [#allocation0], 144
    %233 = vst [vmem:[%s232] sm:%s3] %v231
    %s234 = smul.addr 4, 17
    %s235 = scalar_lea.vmem %s0, %s234
    %v236 = vld [vmem:[%s235] sm:%s3]
    %s237 = scalar_lea.vmem [#allocation0], 136
    %238 = vst [vmem:[%s237] sm:%s3] %v236
    %s239 = smul.addr 4, 16
    %s240 = scalar_lea.vmem %s0, %s239
    %v241 = vld [vmem:[%s240] sm:%s3]
    %s242 = scalar_lea.vmem [#allocation0], 128
    %243 = vst [vmem:[%s242] sm:%s3] %v241
    %s244 = smul.addr 4, 15
    %s245 = scalar_lea.vmem %s0, %s244
    %v246 = vld [vmem:[%s245] sm:%s3]
    %s247 = scalar_lea.vmem [#allocation0], 120
    %248 = vst [vmem:[%s247] sm:%s3] %v246
    %s249 = smul.addr 4, 14
    %s250 = scalar_lea.vmem %s0, %s249
    %v251 = vld [vmem:[%s250] sm:%s3]
    %s252 = scalar_lea.vmem [#allocation0], 112
    %253 = vst [vmem:[%s252] sm:%s3] %v251
    %s254 = smul.addr 4, 13
    %s255 = scalar_lea.vmem %s0, %s254
    %v256 = vld [vmem:[%s255] sm:%s3]
    %s257 = scalar_lea.vmem [#allocation0], 104
    %258 = vst [vmem:[%s257] sm:%s3] %v256
    %s259 = smul.addr 4, 12
    %s260 = scalar_lea.vmem %s0, %s259
    %v261 = vld [vmem:[%s260] sm:%s3]
    %s262 = scalar_lea.vmem [#allocation0], 96
    %263 = vst [vmem:[%s262] sm:%s3] %v261
    %s264 = smul.addr 4, 11
    %s265 = scalar_lea.vmem %s0, %s264
    %v266 = vld [vmem:[%s265] sm:%s3]
    %s267 = scalar_lea.vmem [#allocation0], 88
    %268 = vst [vmem:[%s267] sm:%s3] %v266
    %s269 = smul.addr 4, 10
    %s270 = scalar_lea.vmem %s0, %s269
    %v271 = vld [vmem:[%s270] sm:%s3]
    %s272 = scalar_lea.vmem [#allocation0], 80
    %273 = vst [vmem:[%s272] sm:%s3] %v271
    %s274 = smul.addr 4, 9
    %s275 = scalar_lea.vmem %s0, %s274
    %v276 = vld [vmem:[%s275] sm:%s3]
    %s277 = scalar_lea.vmem [#allocation0], 72
    %278 = vst [vmem:[%s277] sm:%s3] %v276
    %s279 = smul.addr 4, 8
    %s280 = scalar_lea.vmem %s0, %s279
    %v281 = vld [vmem:[%s280] sm:%s3]
    %s282 = scalar_lea.vmem [#allocation0], 64
    %283 = vst [vmem:[%s282] sm:%s3] %v281
    %s284 = smul.addr 4, 7
    %s285 = scalar_lea.vmem %s0, %s284
    %v286 = vld [vmem:[%s285] sm:%s3]
    %s287 = scalar_lea.vmem [#allocation0], 56
    %288 = vst [vmem:[%s287] sm:%s3] %v286
    %s289 = smul.addr 4, 6
    %s290 = scalar_lea.vmem %s0, %s289
    %v291 = vld [vmem:[%s290] sm:%s3]
    %s292 = scalar_lea.vmem [#allocation0], 48
    %293 = vst [vmem:[%s292] sm:%s3] %v291
    %s294 = smul.addr 4, 5
    %s295 = scalar_lea.vmem %s0, %s294
    %v296 = vld [vmem:[%s295] sm:%s3]
    %s297 = scalar_lea.vmem [#allocation0], 40
    %298 = vst [vmem:[%s297] sm:%s3] %v296
    %s299 = smul.addr 4, 4
    %s300 = scalar_lea.vmem %s0, %s299
    %v301 = vld [vmem:[%s300] sm:%s3]
    %s302 = scalar_lea.vmem [#allocation0], 32
    %303 = vst [vmem:[%s302] sm:%s3] %v301
    %s304 = smul.addr 4, 3
    %s305 = scalar_lea.vmem %s0, %s304
    %v306 = vld [vmem:[%s305] sm:%s3]
    %s307 = scalar_lea.vmem [#allocation0], 24
    %308 = vst [vmem:[%s307] sm:%s3] %v306
    %s309 = smul.addr 4, 2
    %s310 = scalar_lea.vmem %s0, %s309
    %v311 = vld [vmem:[%s310] sm:%s3]
    %s312 = scalar_lea.vmem [#allocation0], 16
    %313 = vst [vmem:[%s312] sm:%s3] %v311
    %s314 = scalar_lea.vmem %s0, 4
    %v315 = vld [vmem:[%s314] sm:%s3]
    %s316 = scalar_lea.vmem [#allocation0], 8
    %317 = vst [vmem:[%s316] sm:%s3] %v315
    %v318 = vld [vmem:[%s0] sm:%s3]
    %319 = vst [vmem:[#allocation0] sm:%s3] %v318
    %v320 = vld [vmem:[#allocation0] ss:$8 sm:$0xf]
    %v321 = vld [vmem:[#allocation0] ss:$8 sm:$0xf0]
    %vm322 = vcmask 1047556
    %v323 = vsel %vm322, %v321, %v320
    %vm324 = vcmask 261120
    %325 = vst.msk [vmem:[%s1] sm:$0xff] %vm324, %v323
    %s326 = scalar_lea.vmem [#allocation0], 64
    %v327 = vld [vmem:[%s326] ss:$8 sm:$0xf]
    %s328 = scalar_lea.vmem [#allocation0], 64
    %v329 = vld [vmem:[%s328] ss:$8 sm:$0xf0]
    %vm330 = vcmask 1047556
    %v331 = vsel %vm330, %v329, %v327
    %vm332 = vcmask 261120
    %s333 = scalar_lea.vmem %s1, 8
    %334 = vst.msk [vmem:[%s333] sm:$0xff] %vm332, %v331
    %s335 = scalar_lea.vmem [#allocation0], 128
    %v336 = vld [vmem:[%s335] ss:$8 sm:$0xf]
    %s337 = scalar_lea.vmem [#allocation0], 128
    %v338 = vld [vmem:[%s337] ss:$8 sm:$0xf0]
    %vm339 = vcmask 1047556
    %v340 = vsel %vm339, %v338, %v336
    %vm341 = vcmask 261120
    %s342 = scalar_lea.vmem %s1, 16
    %343 = vst.msk [vmem:[%s342] sm:$0xff] %vm341, %v340
    %s344 = scalar_lea.vmem [#allocation0], 192
    %v345 = vld [vmem:[%s344] ss:$8 sm:$0xf]
    %s346 = scalar_lea.vmem [#allocation0], 192
    %v347 = vld [vmem:[%s346] ss:$8 sm:$0xf0]
    %vm348 = vcmask 1047556
    %v349 = vsel %vm348, %v347, %v345
    %vm350 = vcmask 261120
    %s351 = scalar_lea.vmem %s1, 24
    %352 = vst.msk [vmem:[%s351] sm:$0xff] %vm350, %v349
    %s353 = scalar_lea.vmem [#allocation0], 256
    %v354 = vld [vmem:[%s353] ss:$8 sm:$0xf]
    %s355 = scalar_lea.vmem [#allocation0], 256
    %v356 = vld [vmem:[%s355] ss:$8 sm:$0xf0]
    %vm357 = vcmask 1047556
    %v358 = vsel %vm357, %v356, %v354
    %vm359 = vcmask 261120
    %s360 = scalar_lea.vmem %s1, 32
    %361 = vst.msk [vmem:[%s360] sm:$0xff] %vm359, %v358
    %s362 = scalar_lea.vmem [#allocation0], 320
    %v363 = vld [vmem:[%s362] ss:$8 sm:$0xf]
    %s364 = scalar_lea.vmem [#allocation0], 320
    %v365 = vld [vmem:[%s364] ss:$8 sm:$0xf0]
    %vm366 = vcmask 1047556
    %v367 = vsel %vm366, %v365, %v363
    %vm368 = vcmask 261120
    %s369 = scalar_lea.vmem %s1, 40
    %370 = vst.msk [vmem:[%s369] sm:$0xff] %vm368, %v367
    %s371 = scalar_lea.vmem [#allocation0], 384
    %v372 = vld [vmem:[%s371] ss:$8 sm:$0xf]
    %s373 = scalar_lea.vmem [#allocation0], 384
    %v374 = vld [vmem:[%s373] ss:$8 sm:$0xf0]
    %vm375 = vcmask 1047556
    %v376 = vsel %vm375, %v374, %v372
    %vm377 = vcmask 261120
    %s378 = scalar_lea.vmem %s1, 48
    %379 = vst.msk [vmem:[%s378] sm:$0xff] %vm377, %v376
    %s380 = scalar_lea.vmem [#allocation0], 448
    %v381 = vld [vmem:[%s380] ss:$8 sm:$0xf]
    %s382 = scalar_lea.vmem [#allocation0], 448
    %v383 = vld [vmem:[%s382] ss:$8 sm:$0xf0]
    %vm384 = vcmask 1047556
    %v385 = vsel %vm384, %v383, %v381
    %vm386 = vcmask 261120
    %s387 = scalar_lea.vmem %s1, 56
    %388 = vst.msk [vmem:[%s387] sm:$0xff] %vm386, %v385
    %s389 = scalar_lea.vmem [#allocation0], 3
    %v390 = vld [vmem:[%s389] ss:$8 sm:$0xf]
    %s391 = scalar_lea.vmem [#allocation0], 3
    %v392 = vld [vmem:[%s391] ss:$8 sm:$0xf0]
    %vm393 = vcmask 1047556
    %v394 = vsel %vm393, %v392, %v390
    %395 = vrot.lane.b32.xlu0 %v394, 96
    %v396 = vpop.permute.xlu0 %395
    %vm397 = vcmask 1048320
    %398 = vst.msk [vmem:[%s1] sm:$0xff] %vm397, %v396
    %s399 = scalar_lea.vmem [#allocation0], 259
    %v400 = vld [vmem:[%s399] ss:$8 sm:$0xf]
    %s401 = scalar_lea.vmem [#allocation0], 259
    %v402 = vld [vmem:[%s401] ss:$8 sm:$0xf0]
    %vm403 = vcmask 1047556
    %v404 = vsel %vm403, %v402, %v400
    %405 = vrot.lane.b32.xlu0 %v404, 96
    %v406 = vpop.permute.xlu0 %405
    %vm407 = vcmask 1048320
    %s408 = scalar_lea.vmem %s1, 32
    %409 = vst.msk [vmem:[%s408] sm:$0xff] %vm407, %v406
    %s410 = scalar_lea.vmem [#allocation0], 67
    %v411 = vld [vmem:[%s410] ss:$8 sm:$0xf]
    %s412 = scalar_lea.vmem [#allocation0], 67
    %v413 = vld [vmem:[%s412] ss:$8 sm:$0xf0]
    %vm414 = vcmask 1047556
    %v415 = vsel %vm414, %v413, %v411
    %416 = vrot.lane.b32.xlu0 %v415, 96
    %v417 = vpop.permute.xlu0 %416
    %vm418 = vcmask 1048320
    %s419 = scalar_lea.vmem %s1, 8
    %420 = vst.msk [vmem:[%s419] sm:$0xff] %vm418, %v417
    %s421 = scalar_lea.vmem [#allocation0], 323
    %v422 = vld [vmem:[%s421] ss:$8 sm:$0xf]
    %s423 = scalar_lea.vmem [#allocation0], 323
    %v424 = vld [vmem:[%s423] ss:$8 sm:$0xf0]
    %vm425 = vcmask 1047556
    %v426 = vsel %vm425, %v424, %v422
    %427 = vrot.lane.b32.xlu0 %v426, 96
    %v428 = vpop.permute.xlu0 %427
    %vm429 = vcmask 1048320
    %s430 = scalar_lea.vmem %s1, 40
    %431 = vst.msk [vmem:[%s430] sm:$0xff] %vm429, %v428
    %s432 = scalar_lea.vmem [#allocation0], 131
    %v433 = vld [vmem:[%s432] ss:$8 sm:$0xf]
    %s434 = scalar_lea.vmem [#allocation0], 131
    %v435 = vld [vmem:[%s434] ss:$8 sm:$0xf0]
    %vm436 = vcmask 1047556
    %v437 = vsel %vm436, %v435, %v433
    %438 = vrot.lane.b32.xlu0 %v437, 96
    %v439 = vpop.permute.xlu0 %438
    %vm440 = vcmask 1048320
    %s441 = scalar_lea.vmem %s1, 16
    %442 = vst.msk [vmem:[%s441] sm:$0xff] %vm440, %v439
    %s443 = scalar_lea.vmem [#allocation0], 387
    %v444 = vld [vmem:[%s443] ss:$8 sm:$0xf]
    %s445 = scalar_lea.vmem [#allocation0], 387
    %v446 = vld [vmem:[%s445] ss:$8 sm:$0xf0]
    %vm447 = vcmask 1047556
    %v448 = vsel %vm447, %v446, %v444
    %449 = vrot.lane.b32.xlu0 %v448, 96
    %v450 = vpop.permute.xlu0 %449
    %vm451 = vcmask 1048320
    %s452 = scalar_lea.vmem %s1, 48
    %453 = vst.msk [vmem:[%s452] sm:$0xff] %vm451, %v450
    %s454 = scalar_lea.vmem [#allocation0], 195
    %v455 = vld [vmem:[%s454] ss:$8 sm:$0xf]
    %s456 = scalar_lea.vmem [#allocation0], 195
    %v457 = vld [vmem:[%s456] ss:$8 sm:$0xf0]
    %vm458 = vcmask 1047556
    %v459 = vsel %vm458, %v457, %v455
    %460 = vrot.lane.b32.xlu0 %v459, 96
    %v461 = vpop.permute.xlu0 %460
    %vm462 = vcmask 1048320
    %s463 = scalar_lea.vmem %s1, 24
    %464 = vst.msk [vmem:[%s463] sm:$0xff] %vm462, %v461
    %s465 = scalar_lea.vmem [#allocation0], 451
    %v466 = vld [vmem:[%s465] ss:$8 sm:$0xf]
    %s467 = scalar_lea.vmem [#allocation0], 451
    %v468 = vld [vmem:[%s467] ss:$8 sm:$0xf0]
    %vm469 = vcmask 1047556
    %v470 = vsel %vm469, %v468, %v466
    %471 = vrot.lane.b32.xlu0 %v470, 96
    %v472 = vpop.permute.xlu0 %471
    %vm473 = vcmask 1048320
    %s474 = scalar_lea.vmem %s1, 56
    %475 = vst.msk [vmem:[%s474] sm:$0xff] %vm473, %v472
    %s476 = scalar_lea.vmem [#allocation0], 2
    %v477 = vld [vmem:[%s476] ss:$8 sm:$0xf]
    %s478 = scalar_lea.vmem [#allocation0], 2
    %v479 = vld [vmem:[%s478] ss:$8 sm:$0xf0]
    %vm480 = vcmask 1047556
    %v481 = vsel %vm480, %v479, %v477
    %482 = vrot.lane.b32.xlu0 %v481, 64
    %v483 = vpop.permute.xlu0 %482
    %vm484 = vcmask 785920
    %485 = vst.msk [vmem:[%s1] sm:$0xff] %vm484, %v483
    %s486 = scalar_lea.vmem [#allocation0], 258
    %v487 = vld [vmem:[%s486] ss:$8 sm:$0xf]
    %s488 = scalar_lea.vmem [#allocation0], 258
    %v489 = vld [vmem:[%s488] ss:$8 sm:$0xf0]
    %vm490 = vcmask 1047556
    %v491 = vsel %vm490, %v489, %v487
    %492 = vrot.lane.b32.xlu0 %v491, 64
    %v493 = vpop.permute.xlu0 %492
    %vm494 = vcmask 785920
    %s495 = scalar_lea.vmem %s1, 32
    %496 = vst.msk [vmem:[%s495] sm:$0xff] %vm494, %v493
    %s497 = scalar_lea.vmem [#allocation0], 66
    %v498 = vld [vmem:[%s497] ss:$8 sm:$0xf]
    %s499 = scalar_lea.vmem [#allocation0], 66
    %v500 = vld [vmem:[%s499] ss:$8 sm:$0xf0]
    %vm501 = vcmask 1047556
    %v502 = vsel %vm501, %v500, %v498
    %503 = vrot.lane.b32.xlu0 %v502, 64
    %v504 = vpop.permute.xlu0 %503
    %vm505 = vcmask 785920
    %s506 = scalar_lea.vmem %s1, 8
    %507 = vst.msk [vmem:[%s506] sm:$0xff] %vm505, %v504
    %s508 = scalar_lea.vmem [#allocation0], 322
    %v509 = vld [vmem:[%s508] ss:$8 sm:$0xf]
    %s510 = scalar_lea.vmem [#allocation0], 322
    %v511 = vld [vmem:[%s510] ss:$8 sm:$0xf0]
    %vm512 = vcmask 1047556
    %v513 = vsel %vm512, %v511, %v509
    %514 = vrot.lane.b32.xlu0 %v513, 64
    %v515 = vpop.permute.xlu0 %514
    %vm516 = vcmask 785920
    %s517 = scalar_lea.vmem %s1, 40
    %518 = vst.msk [vmem:[%s517] sm:$0xff] %vm516, %v515
    %s519 = scalar_lea.vmem [#allocation0], 130
    %v520 = vld [vmem:[%s519] ss:$8 sm:$0xf]
    %s521 = scalar_lea.vmem [#allocation0], 130
    %v522 = vld [vmem:[%s521] ss:$8 sm:$0xf0]
    %vm523 = vcmask 1047556
    %v524 = vsel %vm523, %v522, %v520
    %525 = vrot.lane.b32.xlu0 %v524, 64
    %v526 = vpop.permute.xlu0 %525
    %vm527 = vcmask 785920
    %s528 = scalar_lea.vmem %s1, 16
    %529 = vst.msk [vmem:[%s528] sm:$0xff] %vm527, %v526
    %s530 = scalar_lea.vmem [#allocation0], 386
    %v531 = vld [vmem:[%s530] ss:$8 sm:$0xf]
    %s532 = scalar_lea.vmem [#allocation0], 386
    %v533 = vld [vmem:[%s532] ss:$8 sm:$0xf0]
    %vm534 = vcmask 1047556
    %v535 = vsel %vm534, %v533, %v531
    %536 = vrot.lane.b32.xlu0 %v535, 64
    %v537 = vpop.permute.xlu0 %536
    %vm538 = vcmask 785920
    %s539 = scalar_lea.vmem %s1, 48
    %540 = vst.msk [vmem:[%s539] sm:$0xff] %vm538, %v537
    %s541 = scalar_lea.vmem [#allocation0], 194
    %v542 = vld [vmem:[%s541] ss:$8 sm:$0xf]
    %s543 = scalar_lea.vmem [#allocation0], 194
    %v544 = vld [vmem:[%s543] ss:$8 sm:$0xf0]
    %vm545 = vcmask 1047556
    %v546 = vsel %vm545, %v544, %v542
    %547 = vrot.lane.b32.xlu0 %v546, 64
    %v548 = vpop.permute.xlu0 %547
    %vm549 = vcmask 785920
    %s550 = scalar_lea.vmem %s1, 24
    %551 = vst.msk [vmem:[%s550] sm:$0xff] %vm549, %v548
    %s552 = scalar_lea.vmem [#allocation0], 450
    %v553 = vld [vmem:[%s552] ss:$8 sm:$0xf]
    %s554 = scalar_lea.vmem [#allocation0], 450
    %v555 = vld [vmem:[%s554] ss:$8 sm:$0xf0]
    %vm556 = vcmask 1047556
    %v557 = vsel %vm556, %v555, %v553
    %558 = vrot.lane.b32.xlu0 %v557, 64
    %v559 = vpop.permute.xlu0 %558
    %vm560 = vcmask 785920
    %s561 = scalar_lea.vmem %s1, 56
    %562 = vst.msk [vmem:[%s561] sm:$0xff] %vm560, %v559
    %s563 = scalar_lea.vmem [#allocation0], 1
    %v564 = vld [vmem:[%s563] ss:$8 sm:$0xf]
    %s565 = scalar_lea.vmem [#allocation0], 1
    %v566 = vld [vmem:[%s565] ss:$8 sm:$0xf0]
    %vm567 = vcmask 1047556
    %v568 = vsel %vm567, %v566, %v564
    %569 = vrot.lane.b32.xlu0 %v568, 32
    %v570 = vpop.permute.xlu0 %569
    %vm571 = vcmask 523520
    %572 = vst.msk [vmem:[%s1] sm:$0xff] %vm571, %v570
    %s573 = scalar_lea.vmem [#allocation0], 257
    %v574 = vld [vmem:[%s573] ss:$8 sm:$0xf]
    %s575 = scalar_lea.vmem [#allocation0], 257
    %v576 = vld [vmem:[%s575] ss:$8 sm:$0xf0]
    %vm577 = vcmask 1047556
    %v578 = vsel %vm577, %v576, %v574
    %579 = vrot.lane.b32.xlu0 %v578, 32
    %v580 = vpop.permute.xlu0 %579
    %vm581 = vcmask 523520
    %s582 = scalar_lea.vmem %s1, 32
    %583 = vst.msk [vmem:[%s582] sm:$0xff] %vm581, %v580
    %s584 = scalar_lea.vmem [#allocation0], 65
    %v585 = vld [vmem:[%s584] ss:$8 sm:$0xf]
    %s586 = scalar_lea.vmem [#allocation0], 65
    %v587 = vld [vmem:[%s586] ss:$8 sm:$0xf0]
    %vm588 = vcmask 1047556
    %v589 = vsel %vm588, %v587, %v585
    %590 = vrot.lane.b32.xlu0 %v589, 32
    %v591 = vpop.permute.xlu0 %590
    %vm592 = vcmask 523520
    %s593 = scalar_lea.vmem %s1, 8
    %594 = vst.msk [vmem:[%s593] sm:$0xff] %vm592, %v591
    %s595 = scalar_lea.vmem [#allocation0], 321
    %v596 = vld [vmem:[%s595] ss:$8 sm:$0xf]
    %s597 = scalar_lea.vmem [#allocation0], 321
    %v598 = vld [vmem:[%s597] ss:$8 sm:$0xf0]
    %vm599 = vcmask 1047556
    %v600 = vsel %vm599, %v598, %v596
    %601 = vrot.lane.b32.xlu0 %v600, 32
    %v602 = vpop.permute.xlu0 %601
    %vm603 = vcmask 523520
    %s604 = scalar_lea.vmem %s1, 40
    %605 = vst.msk [vmem:[%s604] sm:$0xff] %vm603, %v602
    %s606 = scalar_lea.vmem [#allocation0], 129
    %v607 = vld [vmem:[%s606] ss:$8 sm:$0xf]
    %s608 = scalar_lea.vmem [#allocation0], 129
    %v609 = vld [vmem:[%s608] ss:$8 sm:$0xf0]
    %vm610 = vcmask 1047556
    %v611 = vsel %vm610, %v609, %v607
    %612 = vrot.lane.b32.xlu0 %v611, 32
    %v613 = vpop.permute.xlu0 %612
    %vm614 = vcmask 523520
    %s615 = scalar_lea.vmem %s1, 16
    %616 = vst.msk [vmem:[%s615] sm:$0xff] %vm614, %v613
    %s617 = scalar_lea.vmem [#allocation0], 385
    %v618 = vld [vmem:[%s617] ss:$8 sm:$0xf]
    %s619 = scalar_lea.vmem [#allocation0], 385
    %v620 = vld [vmem:[%s619] ss:$8 sm:$0xf0]
    %vm621 = vcmask 1047556
    %v622 = vsel %vm621, %v620, %v618
    %623 = vrot.lane.b32.xlu0 %v622, 32
    %v624 = vpop.permute.xlu0 %623
    %vm625 = vcmask 523520
    %s626 = scalar_lea.vmem %s1, 48
    %627 = vst.msk [vmem:[%s626] sm:$0xff] %vm625, %v624
    %s628 = scalar_lea.vmem [#allocation0], 193
    %v629 = vld [vmem:[%s628] ss:$8 sm:$0xf]
    %s630 = scalar_lea.vmem [#allocation0], 193
    %v631 = vld [vmem:[%s630] ss:$8 sm:$0xf0]
    %vm632 = vcmask 1047556
    %v633 = vsel %vm632, %v631, %v629
    %634 = vrot.lane.b32.xlu0 %v633, 32
    %v635 = vpop.permute.xlu0 %634
    %vm636 = vcmask 523520
    %s637 = scalar_lea.vmem %s1, 24
    %638 = vst.msk [vmem:[%s637] sm:$0xff] %vm636, %v635
    %s639 = scalar_lea.vmem [#allocation0], 449
    %v640 = vld [vmem:[%s639] ss:$8 sm:$0xf]
    %s641 = scalar_lea.vmem [#allocation0], 449
    %v642 = vld [vmem:[%s641] ss:$8 sm:$0xf0]
    %vm643 = vcmask 1047556
    %v644 = vsel %vm643, %v642, %v640
    %645 = vrot.lane.b32.xlu0 %v644, 32
    %v646 = vpop.permute.xlu0 %645
    %vm647 = vcmask 523520
    %s648 = scalar_lea.vmem %s1, 56
    %649 = vst.msk [vmem:[%s648] sm:$0xff] %vm647, %v646

// kernel: vector_transformer.1
$region0: #{vector_transformer.1}
  #allocation0 [shape = 'u32[]', space=smem, size = 0x4, offset = 0x4, fixed_abs, tag = 'smem constant byte address 0x4 - core index']
  #allocation1 [shape = 'u32[144,128]{1,0:T(1,128)}', space=vmem, size = 0x12000, scoped, tag = 'internal scratch']
  %s0 = inlined_call_operand.vmem [shape: f32[8,16], index: 0, kind: input, shape index: {}]
  %s1 = inlined_call_operand.vmem [shape: f32[16,32], index: 1, kind: input, shape index: {}]
  %s2 = inlined_call_operand.vmem [shape: f32[1,32], index: 2, kind: input, shape index: {}]
  %s3 = inlined_call_operand.vmem [shape: f32[2,32,384], index: 3, kind: input, shape index: {}]
  %s4 = inlined_call_operand.vmem [shape: f32[2,1,384], index: 4, kind: input, shape index: {}]
  %s5 = inlined_call_operand.vmem [shape: f32[2,128,32], index: 5, kind: input, shape index: {}]
  %s6 = inlined_call_operand.vmem [shape: f32[2,1,32], index: 6, kind: input, shape index: {}]
  %s7 = inlined_call_operand.vmem [shape: f32[2,1,32], index: 7, kind: input, shape index: {}]
  %s8 = inlined_call_operand.vmem [shape: f32[2,1,32], index: 8, kind: input, shape index: {}]
  %s9 = inlined_call_operand.vmem [shape: f32[2,32,32], index: 9, kind: input, shape index: {}]
  %s10 = inlined_call_operand.vmem [shape: f32[2,1,32], index: 10, kind: input, shape index: {}]
  %s11 = inlined_call_operand.vmem [shape: f32[2,1,32], index: 11, kind: input, shape index: {}]
  %s12 = inlined_call_operand.vmem [shape: f32[2,1,32], index: 12, kind: input, shape index: {}]
  %s13 = inlined_call_operand.vmem [shape: f32[128,16], index: 13, kind: input, shape index: {}]
  %s14 = inlined_call_operand.vmem [shape: f32[16,16], index: 14, kind: input, shape index: {}]
  %s15 = inlined_call_operand.vmem [shape: f32[16,128], index: 15, kind: input, shape index: {}]
  %s16 = inlined_call_operand.vmem [shape: f32[32,128], index: 16, kind: input, shape index: {}]
  %s17 = inlined_call_operand.hbm [shape: f32[8,128], index: 17, kind: output, shape index: {}]
  %s18 = sld [smem:[#allocation0]]
  $region78: #{vector_transformer.1} parent=0
    _
  %s20 = ssub.s32 1, %s18
  %s21 = scalar_select 0, %s20, %s18
  $region1: #{vector_transformer.1} parent=0
    #allocation2 [shape = 'u8[4096]{0}', space=vmem, size = 0x1000, scoped, tag = 'output window, operand 0, single buffered']
    #allocation3 [shape = 's32[1]{0}', space=sflag, size = 0x4, scoped, tag = 'scoped memory for vector_transformer.1']
    %22 = vsyncpa [#allocation3], 0
    // Predicated region
    $region2: #{vector_transformer.1} parent=1 // pred_check
      _
    $region3: #{vector_transformer.1} parent=1 // pred_check_branch
      %24 = sbr.rel (0) target = $region5
    $region4: #{vector_transformer.1} parent=1 // pred_region
      _
    $region5: #{vector_transformer.1} parent=1 // pred_fallthru
      _
    // Predicated region
    $region6: #{vector_transformer.1} parent=1 // pred_check
      _
    $region7: #{vector_transformer.1} parent=1 // pred_check_branch
      %26 = sbr.rel (0) target = $region9
    $region8: #{vector_transformer.1} parent=1 // pred_region
      _
    $region9: #{vector_transformer.1} parent=1 // pred_fallthru
      _
    // Predicated region
    $region10: #{vector_transformer.1} parent=1 // pred_check
      _
    $region11: #{vector_transformer.1} parent=1 // pred_check_branch
      %28 = sbr.rel (0) target = $region13
    $region12: #{vector_transformer.1} parent=1 // pred_region
      _
    $region13: #{vector_transformer.1} parent=1 // pred_fallthru
      _
    // Predicated region
    $region14: #{vector_transformer.1} parent=1 // pred_check
      _
    $region15: #{vector_transformer.1} parent=1 // pred_check_branch
      %30 = sbr.rel (0) target = $region17
    $region16: #{vector_transformer.1} parent=1 // pred_region
      _
    $region17: #{vector_transformer.1} parent=1 // pred_fallthru
      _
    // Predicated region
    $region18: #{vector_transformer.1} parent=1 // pred_check
      _
    $region19: #{vector_transformer.1} parent=1 // pred_check_branch
      %32 = sbr.rel (0) target = $region21
    $region20: #{vector_transformer.1} parent=1 // pred_region
      _
    $region21: #{vector_transformer.1} parent=1 // pred_fallthru
      _
    // Predicated region
    $region22: #{vector_transformer.1} parent=1 // pred_check
      _
    $region23: #{vector_transformer.1} parent=1 // pred_check_branch
      %34 = sbr.rel (0) target = $region25
    $region24: #{vector_transformer.1} parent=1 // pred_region
      _
    $region25: #{vector_transformer.1} parent=1 // pred_fallthru
      _
    // Predicated region
    $region26: #{vector_transformer.1} parent=1 // pred_check
      _
    $region27: #{vector_transformer.1} parent=1 // pred_check_branch
      %36 = sbr.rel (0) target = $region29
    $region28: #{vector_transformer.1} parent=1 // pred_region
      _
    $region29: #{vector_transformer.1} parent=1 // pred_fallthru
      _
    // Predicated region
    $region30: #{vector_transformer.1} parent=1 // pred_check
      _
    $region31: #{vector_transformer.1} parent=1 // pred_check_branch
      %38 = sbr.rel (0) target = $region33
    $region32: #{vector_transformer.1} parent=1 // pred_region
      _
    $region33: #{vector_transformer.1} parent=1 // pred_fallthru
      _
    // Predicated region
    $region34: #{vector_transformer.1} parent=1 // pred_check
      _
    $region35: #{vector_transformer.1} parent=1 // pred_check_branch
      %40 = sbr.rel (0) target = $region37
    $region36: #{vector_transformer.1} parent=1 // pred_region
      _
    $region37: #{vector_transformer.1} parent=1 // pred_fallthru
      _
    // Predicated region
    $region38: #{vector_transformer.1} parent=1 // pred_check
      _
    $region39: #{vector_transformer.1} parent=1 // pred_check_branch
      %42 = sbr.rel (0) target = $region41
    $region40: #{vector_transformer.1} parent=1 // pred_region
      _
    $region41: #{vector_transformer.1} parent=1 // pred_fallthru
      _
    // Predicated region
    $region42: #{vector_transformer.1} parent=1 // pred_check
      _
    $region43: #{vector_transformer.1} parent=1 // pred_check_branch
      %44 = sbr.rel (0) target = $region45
    $region44: #{vector_transformer.1} parent=1 // pred_region
      _
    $region45: #{vector_transformer.1} parent=1 // pred_fallthru
      _
    // Predicated region
    $region46: #{vector_transformer.1} parent=1 // pred_check
      _
    $region47: #{vector_transformer.1} parent=1 // pred_check_branch
      %46 = sbr.rel (0) target = $region49
    $region48: #{vector_transformer.1} parent=1 // pred_region
      _
    $region49: #{vector_transformer.1} parent=1 // pred_fallthru
      _
    // Predicated region
    $region50: #{vector_transformer.1} parent=1 // pred_check
      _
    $region51: #{vector_transformer.1} parent=1 // pred_check_branch
      %48 = sbr.rel (0) target = $region53
    $region52: #{vector_transformer.1} parent=1 // pred_region
      _
    $region53: #{vector_transformer.1} parent=1 // pred_fallthru
      _
    // Predicated region
    $region54: #{vector_transformer.1} parent=1 // pred_check
      _
    $region55: #{vector_transformer.1} parent=1 // pred_check_branch
      %50 = sbr.rel (0) target = $region57
    $region56: #{vector_transformer.1} parent=1 // pred_region
      _
    $region57: #{vector_transformer.1} parent=1 // pred_fallthru
      _
    // Predicated region
    $region58: #{vector_transformer.1} parent=1 // pred_check
      _
    $region59: #{vector_transformer.1} parent=1 // pred_check_branch
      %52 = sbr.rel (0) target = $region61
    $region60: #{vector_transformer.1} parent=1 // pred_region
      _
    $region61: #{vector_transformer.1} parent=1 // pred_fallthru
      _
    // Predicated region
    $region62: #{vector_transformer.1} parent=1 // pred_check
      _
    $region63: #{vector_transformer.1} parent=1 // pred_check_branch
      %54 = sbr.rel (0) target = $region65
    $region64: #{vector_transformer.1} parent=1 // pred_region
      _
    $region65: #{vector_transformer.1} parent=1 // pred_fallthru
      _
    // Predicated region
    $region66: #{vector_transformer.1} parent=1 // pred_check
      _
    $region67: #{vector_transformer.1} parent=1 // pred_check_branch
      %56 = sbr.rel (0) target = $region69
    $region68: #{vector_transformer.1} parent=1 // pred_region
      _
    $region69: #{vector_transformer.1} parent=1 // pred_fallthru
      _
    %v57 = vld [vmem:[%s0] sm:$0xff]
    %vm58 = vcmask 130048
    %v59 = vsel %vm58, %v57, 0.0
    %v60 = vrot.slane %v59, 4
    %v61 = vadd.f32 %v59, %v60
    %v62 = vrot.slane %v61, 2
    %v63 = vadd.f32 %v61, %v62
    %v64 = vrot.slane %v63, 1
    %v65 = vadd.f32 %v63, %v64
    %v66 = vrcp.pop 8.0
    %v67 = vmul.f32 %v65, %v66
    %v68 = vsub.f32 %v57, %v67
    %v69 = vmul.f32 %v68, %v68
    %v70 = vsel %vm58, %v69, 0.0
    %v71 = vrot.slane %v70, 4
    %v72 = vadd.f32 %v70, %v71
    %v73 = vrot.slane %v72, 2
    %v74 = vadd.f32 %v72, %v73
    %v75 = vrot.slane %v74, 1
    %v76 = vadd.f32 %v74, %v75
    %v77 = vmul.f32 %v76, %v66
    %v78 = vadd.f32 %v77, 1e-05
    %v79 = vrsqrt.pop %v78
    %v80 = vmul.f32 %v68, %v79
    %v81 = vld [vmem:[%s1] sm:$0xff]
    %v82 = vld [vmem:[%s1 + $0x8] sm:$0xff]
    %v83 = vld [vmem:[%s2] sm:$0x1]
    %v85 = vlaneseq
    %v86 = vshrl.u32 %v85, 7
    %v87 = vsub.s32 0, %v86
    %v88 = vrot.slane %v83, %v87
    %v91 = vsel %vm58, %v80, 0
    %93 = vmatprep.subr.mxu0 0.0
    %94 = vmatpush1.msra.mxu0 %v81
    %95 = vmatprep.subr.mxu0 0.0
    %96 = vmatpush1.msra.mxu0 %v82
    %97 = vmatprep.subr.mxu0 0.0
    %98 = vmatpush1.msra.mxu0 0.0
    %99 = vmatprep.subr.mxu0 0.0
    %100 = vmatpush1.msra.mxu0 0.0
    %101 = vmatprep.subr.mxu0 0.0
    %102 = vmatpush1.msra.mxu0 0.0
    %103 = vmatprep.subr.mxu0 0.0
    %104 = vmatpush1.msra.mxu0 0.0
    %105 = vmatprep.subr.mxu0 0.0
    %106 = vmatpush1.msra.mxu0 0.0
    %107 = vmatprep.subr.mxu0 0.0
    %108 = vmatpush1.msra.mxu0 0.0
    %109 = vmatprep.subr.mxu0 0.0
    %110 = vmatpush1.msra.mxu0 0.0
    %111 = vmatprep.subr.mxu0 0.0
    %112 = vmatpush1.msra.mxu0 0.0
    %113 = vmatprep.subr.mxu0 0.0
    %114 = vmatpush1.msra.mxu0 0.0
    %115 = vmatprep.subr.mxu0 0.0
    %116 = vmatpush1.msra.mxu0 0.0
    %117 = vmatprep.subr.mxu0 0.0
    %118 = vmatpush1.msra.mxu0 0.0
    %119 = vmatprep.subr.mxu0 0.0
    %120 = vmatpush1.msra.mxu0 0.0
    %121 = vmatprep.subr.mxu0 0.0
    %122 = vmatpush1.msra.mxu0 0.0
    %123 = vmatprep.subr.mxu0 0.0
    %124 = vmatpush1.msra.mxu0 0.0
    %125 = vmatprep.subr.mxu0 0.0
    %126 = vmatpush1.msra.mxu0 0.0
    %127 = vmatprep.subr.mxu0 0.0
    %128 = vmatpush1.msra.mxu0 0.0
    %129 = vmatprep.subr.mxu0 0.0
    %130 = vmatpush1.msra.mxu0 0.0
    %131 = vmatprep.subr.mxu0 0.0
    %132 = vmatpush1.msra.mxu0 0.0
    %133 = vmatprep.subr.mxu0 0.0
    %134 = vmatpush1.msra.mxu0 0.0
    %135 = vmatprep.subr.mxu0 0.0
    %136 = vmatpush1.msra.mxu0 0.0
    %137 = vmatprep.subr.mxu0 0.0
    %138 = vmatpush1.msra.mxu0 0.0
    %139 = vmatprep.subr.mxu0 0.0
    %140 = vmatpush1.msra.mxu0 0.0
    %141 = vmatprep.subr.mxu0 0.0
    %142 = vmatpush1.msra.mxu0 0.0
    %143 = vmatprep.subr.mxu0 0.0
    %144 = vmatpush1.msra.mxu0 0.0
    %145 = vmatprep.subr.mxu0 0.0
    %146 = vmatpush1.msra.mxu0 0.0
    %147 = vmatprep.subr.mxu0 0.0
    %148 = vmatpush1.msra.mxu0 0.0
    %149 = vmatprep.subr.mxu0 0.0
    %150 = vmatpush1.msra.mxu0 0.0
    %151 = vmatprep.subr.mxu0 0.0
    %152 = vmatpush1.msra.mxu0 0.0
    %153 = vmatprep.subr.mxu0 0.0
    %154 = vmatpush1.msra.mxu0 0.0
    %155 = vmatprep.subr.mxu0 0.0
    %156 = vmatpush1.msra.mxu0 0.0
    %157 = vmatprep.mubr.f32.mxu0 0.0
    %158 = vmatmul.mubr.f32.gmra.mrb[0].mxu0 %v91
    %v159 = vpop.f32.mrb[0].mxu0
    %v160 = vadd.f32 %v88, %v159
    %v161 = vpop.f32.mrb[0].mxu0
    %162 = vdwg.mxu0
    %v163 = vmax.f32 %v160, 0.0
    %v164 = vld [vmem:[%s13] sm:$0xff]
    %v165 = vld [vmem:[%s13 + $0x8] sm:$0xff]
    %v166 = vld [vmem:[%s13 + $0x10] sm:$0xff]
    %v167 = vld [vmem:[%s13 + $0x18] sm:$0xff]
    %v168 = vld [vmem:[%s13 + $0x20] sm:$0xff]
    %v169 = vld [vmem:[%s13 + $0x28] sm:$0xff]
    %v170 = vld [vmem:[%s13 + $0x30] sm:$0xff]
    %v171 = vld [vmem:[%s13 + $0x38] sm:$0xff]
    %v172 = vld [vmem:[%s13 + $0x40] sm:$0xff]
    %v173 = vld [vmem:[%s13 + $0x48] sm:$0xff]
    %v174 = vld [vmem:[%s13 + $0x50] sm:$0xff]
    %v175 = vld [vmem:[%s13 + $0x58] sm:$0xff]
    %v176 = vld [vmem:[%s13 + $0x60] sm:$0xff]
    %v177 = vld [vmem:[%s13 + $0x68] sm:$0xff]
    %v178 = vld [vmem:[%s13 + $0x70] sm:$0xff]
    %v179 = vld [vmem:[%s13 + $0x78] sm:$0xff]
    %v180 = vld [vmem:[%s14] sm:$0xff]
    %v181 = vld [vmem:[%s14 + $0x8] sm:$0xff]
    %v182 = vld [vmem:[%s15] sm:$0xff]
    %v183 = vld [vmem:[%s15 + $0x8] sm:$0xff]
    %v184 = vld [vmem:[%s3] sm:$0xff]
    %v185 = vld [vmem:[%s3 + $0x8] sm:$0xff]
    %v186 = vld [vmem:[%s3 + $0x10] sm:$0xff]
    %v187 = vld [vmem:[%s3 + $0x18] sm:$0xff]
    %v188 = vld [vmem:[%s3 + $0x20] sm:$0xff]
    %v189 = vld [vmem:[%s3 + $0x28] sm:$0xff]
    %v190 = vld [vmem:[%s3 + $0x30] sm:$0xff]
    %v191 = vld [vmem:[%s3 + $0x38] sm:$0xff]
    %v192 = vld [vmem:[%s3 + $0x40] sm:$0xff]
    %v193 = vld [vmem:[%s3 + $0x48] sm:$0xff]
    %v194 = vld [vmem:[%s3 + $0x50] sm:$0xff]
    %v195 = vld [vmem:[%s3 + $0x58] sm:$0xff]
    %v196 = vld [vmem:[%s4] sm:$0x7]
    %v198 = vlaneseq
    %v199 = vshrl.u32 %v198, 7
    %v200 = vsub.s32 0, %v199
    %v201 = vrot.slane %v196, %v200
    %v202 = vlaneseq
    %v203 = vshrl.u32 %v202, 7
    %v204 = vsub.s32 1, %v203
    %v205 = vrot.slane %v196, %v204
    %v206 = vlaneseq
    %v207 = vshrl.u32 %v206, 7
    %v208 = vsub.s32 2, %v207
    %v209 = vrot.slane %v196, %v208
    %vm213 = vcmask 261120
    %v215 = vsel %vm213, %v163, 0
    %217 = vmatprep.subr.mxu0 %v185
    %218 = vmatpush1.msra.mxu0 %v184
    %219 = vmatprep.subr.mxu0 %v188
    %220 = vmatpush1.msra.mxu0 %v187
    %221 = vmatprep.subr.mxu0 %v191
    %222 = vmatpush1.msra.mxu0 %v190
    %223 = vmatprep.subr.mxu0 %v194
    %224 = vmatpush1.msra.mxu0 %v193
    %225 = vmatprep.subr.mxu0 0.0
    %226 = vmatpush1.msra.mxu0 0.0
    %227 = vmatprep.subr.mxu0 0.0
    %228 = vmatpush1.msra.mxu0 0.0
    %229 = vmatprep.subr.mxu0 0.0
    %230 = vmatpush1.msra.mxu0 0.0
    %231 = vmatprep.subr.mxu0 0.0
    %232 = vmatpush1.msra.mxu0 0.0
    %233 = vmatprep.subr.mxu0 0.0
    %234 = vmatpush1.msra.mxu0 0.0
    %235 = vmatprep.subr.mxu0 0.0
    %236 = vmatpush1.msra.mxu0 0.0
    %237 = vmatprep.subr.mxu0 0.0
    %238 = vmatpush1.msra.mxu0 0.0
    %239 = vmatprep.subr.mxu0 0.0
    %240 = vmatpush1.msra.mxu0 0.0
    %241 = vmatprep.subr.mxu0 0.0
    %242 = vmatpush1.msra.mxu0 0.0
    %243 = vmatprep.subr.mxu0 0.0
    %244 = vmatpush1.msra.mxu0 0.0
    %245 = vmatprep.subr.mxu0 0.0
    %246 = vmatpush1.msra.mxu0 0.0
    %247 = vmatprep.subr.mxu0 0.0
    %248 = vmatpush1.msra.mxu0 0.0
    %249 = vmatprep.subr.mxu0 0.0
    %250 = vmatpush1.msra.mxu0 0.0
    %251 = vmatprep.subr.mxu0 0.0
    %252 = vmatpush1.msra.mxu0 0.0
    %253 = vmatprep.subr.mxu0 0.0
    %254 = vmatpush1.msra.mxu0 0.0
    %255 = vmatprep.subr.mxu0 0.0
    %256 = vmatpush1.msra.mxu0 0.0
    %257 = vmatprep.subr.mxu0 0.0
    %258 = vmatpush1.msra.mxu0 0.0
    %259 = vmatprep.subr.mxu0 0.0
    %260 = vmatpush1.msra.mxu0 0.0
    %261 = vmatprep.subr.mxu0 0.0
    %262 = vmatpush1.msra.mxu0 0.0
    %263 = vmatprep.subr.mxu0 0.0
    %264 = vmatpush1.msra.mxu0 0.0
    %265 = vmatprep.subr.mxu0 0.0
    %266 = vmatpush1.msra.mxu0 0.0
    %267 = vmatprep.subr.mxu0 0.0
    %268 = vmatpush1.msra.mxu0 0.0
    %269 = vmatprep.subr.mxu0 0.0
    %270 = vmatpush1.msra.mxu0 0.0
    %271 = vmatprep.subr.mxu0 0.0
    %272 = vmatpush1.msra.mxu0 0.0
    %273 = vmatprep.subr.mxu0 0.0
    %274 = vmatpush1.msra.mxu0 0.0
    %275 = vmatprep.subr.mxu0 0.0
    %276 = vmatpush1.msra.mxu0 0.0
    %277 = vmatprep.subr.mxu0 0.0
    %278 = vmatpush1.msra.mxu0 0.0
    %279 = vmatprep.subr.mxu0 0.0
    %280 = vmatpush1.msra.mxu0 0.0
    %281 = vmatprep.mubr.f32.mxu0 0.0
    %282 = vmatmul.mubr.f32.gmra.mrb[0].mxu0 %v215
    %v283 = vpop.f32.mrb[0].mxu0
    %v284 = vadd.f32 %v201, %v283
    %v285 = vpop.f32.mrb[0].mxu0
    %v286 = vadd.f32 %v205, %v285
    %287 = vdwg.mxu0
    %288 = vmatprep.subr.mxu0 0.0
    %289 = vmatpush1.msra.mxu0 %v186
    %290 = vmatprep.subr.mxu0 0.0
    %291 = vmatpush1.msra.mxu0 %v189
    %292 = vmatprep.subr.mxu0 0.0
    %293 = vmatpush1.msra.mxu0 %v192
    %294 = vmatprep.subr.mxu0 0.0
    %295 = vmatpush1.msra.mxu0 %v195
    %296 = vmatprep.subr.mxu0 0.0
    %297 = vmatpush1.msra.mxu0 0.0
    %298 = vmatprep.subr.mxu0 0.0
    %299 = vmatpush1.msra.mxu0 0.0
    %300 = vmatprep.subr.mxu0 0.0
    %301 = vmatpush1.msra.mxu0 0.0
    %302 = vmatprep.subr.mxu0 0.0
    %303 = vmatpush1.msra.mxu0 0.0
    %304 = vmatprep.subr.mxu0 0.0
    %305 = vmatpush1.msra.mxu0 0.0
    %306 = vmatprep.subr.mxu0 0.0
    %307 = vmatpush1.msra.mxu0 0.0
    %308 = vmatprep.subr.mxu0 0.0
    %309 = vmatpush1.msra.mxu0 0.0
    %310 = vmatprep.subr.mxu0 0.0
    %311 = vmatpush1.msra.mxu0 0.0
    %312 = vmatprep.subr.mxu0 0.0
    %313 = vmatpush1.msra.mxu0 0.0
    %314 = vmatprep.subr.mxu0 0.0
    %315 = vmatpush1.msra.mxu0 0.0
    %316 = vmatprep.subr.mxu0 0.0
    %317 = vmatpush1.msra.mxu0 0.0
    %318 = vmatprep.subr.mxu0 0.0
    %319 = vmatpush1.msra.mxu0 0.0
    %320 = vmatprep.subr.mxu0 0.0
    %321 = vmatpush1.msra.mxu0 0.0
    %322 = vmatprep.subr.mxu0 0.0
    %323 = vmatpush1.msra.mxu0 0.0
    %324 = vmatprep.subr.mxu0 0.0
    %325 = vmatpush1.msra.mxu0 0.0
    %326 = vmatprep.subr.mxu0 0.0
    %327 = vmatpush1.msra.mxu0 0.0
    %328 = vmatprep.subr.mxu0 0.0
    %329 = vmatpush1.msra.mxu0 0.0
    %330 = vmatprep.subr.mxu0 0.0
    %331 = vmatpush1.msra.mxu0 0.0
    %332 = vmatprep.subr.mxu0 0.0
    %333 = vmatpush1.msra.mxu0 0.0
    %334 = vmatprep.subr.mxu0 0.0
    %335 = vmatpush1.msra.mxu0 0.0
    %336 = vmatprep.subr.mxu0 0.0
    %337 = vmatpush1.msra.mxu0 0.0
    %338 = vmatprep.subr.mxu0 0.0
    %339 = vmatpush1.msra.mxu0 0.0
    %340 = vmatprep.subr.mxu0 0.0
    %341 = vmatpush1.msra.mxu0 0.0
    %342 = vmatprep.subr.mxu0 0.0
    %343 = vmatpush1.msra.mxu0 0.0
    %344 = vmatprep.subr.mxu0 0.0
    %345 = vmatpush1.msra.mxu0 0.0
    %346 = vmatprep.subr.mxu0 0.0
    %347 = vmatpush1.msra.mxu0 0.0
    %348 = vmatprep.subr.mxu0 0.0
    %349 = vmatpush1.msra.mxu0 0.0
    %350 = vmatprep.subr.mxu0 0.0
    %351 = vmatpush1.msra.mxu0 0.0
    %352 = vmatprep.mubr.f32.mxu0 0.0
    %353 = vmatmul.mubr.f32.gmra.mrb[0].mxu0 %v215
    %v354 = vpop.f32.mrb[0].mxu0
    %v355 = vadd.f32 %v209, %v354
    %v356 = vpop.f32.mrb[0].mxu0
    %357 = vdwg.mxu0
    %v358 = vmul.f32 %v284, %v286
    %359 = vmatprep.subr.mxu0 0.0
    %360 = vmatpush1.msra.mxu0 %v164
    %361 = vmatprep.subr.mxu0 0.0
    %362 = vmatpush1.msra.mxu0 %v165
    %363 = vmatprep.subr.mxu0 0.0
    %364 = vmatpush1.msra.mxu0 %v166
    %365 = vmatprep.subr.mxu0 0.0
    %366 = vmatpush1.msra.mxu0 %v167
    %367 = vmatprep.subr.mxu0 0.0
    %368 = vmatpush1.msra.mxu0 %v168
    %369 = vmatprep.subr.mxu0 0.0
    %370 = vmatpush1.msra.mxu0 %v169
    %371 = vmatprep.subr.mxu0 0.0
    %372 = vmatpush1.msra.mxu0 %v170
    %373 = vmatprep.subr.mxu0 0.0
    %374 = vmatpush1.msra.mxu0 %v171
    %375 = vmatprep.subr.mxu0 0.0
    %376 = vmatpush1.msra.mxu0 %v172
    %377 = vmatprep.subr.mxu0 0.0
    %378 = vmatpush1.msra.mxu0 %v173
    %379 = vmatprep.subr.mxu0 0.0
    %380 = vmatpush1.msra.mxu0 %v174
    %381 = vmatprep.subr.mxu0 0.0
    %382 = vmatpush1.msra.mxu0 %v175
    %383 = vmatprep.subr.mxu0 0.0
    %384 = vmatpush1.msra.mxu0 %v176
    %385 = vmatprep.subr.mxu0 0.0
    %386 = vmatpush1.msra.mxu0 %v177
    %387 = vmatprep.subr.mxu0 0.0
    %388 = vmatpush1.msra.mxu0 %v178
    %389 = vmatprep.subr.mxu0 0.0
    %390 = vmatpush1.msra.mxu0 %v179
    %391 = vmatprep.subr.mxu0 0.0
    %392 = vmatpush1.msra.mxu0 0.0
    %393 = vmatprep.subr.mxu0 0.0
    %394 = vmatpush1.msra.mxu0 0.0
    %395 = vmatprep.subr.mxu0 0.0
    %396 = vmatpush1.msra.mxu0 0.0
    %397 = vmatprep.subr.mxu0 0.0
    %398 = vmatpush1.msra.mxu0 0.0
    %399 = vmatprep.subr.mxu0 0.0
    %400 = vmatpush1.msra.mxu0 0.0
    %401 = vmatprep.subr.mxu0 0.0
    %402 = vmatpush1.msra.mxu0 0.0
    %403 = vmatprep.subr.mxu0 0.0
    %404 = vmatpush1.msra.mxu0 0.0
    %405 = vmatprep.subr.mxu0 0.0
    %406 = vmatpush1.msra.mxu0 0.0
    %407 = vmatprep.subr.mxu0 0.0
    %408 = vmatpush1.msra.mxu0 0.0
    %409 = vmatprep.subr.mxu0 0.0
    %410 = vmatpush1.msra.mxu0 0.0
    %411 = vmatprep.subr.mxu0 0.0
    %412 = vmatpush1.msra.mxu0 0.0
    %413 = vmatprep.subr.mxu0 0.0
    %414 = vmatpush1.msra.mxu0 0.0
    %415 = vmatprep.subr.mxu0 0.0
    %416 = vmatpush1.msra.mxu0 0.0
    %417 = vmatprep.subr.mxu0 0.0
    %418 = vmatpush1.msra.mxu0 0.0
    %419 = vmatprep.subr.mxu0 0.0
    %420 = vmatpush1.msra.mxu0 0.0
    %421 = vmatprep.subr.mxu0 0.0
    %422 = vmatpush1.msra.mxu0 0.0
    %423 = vmatprep.mubr.f32.mxu0 0.0
    %424 = vmatmul.mubr.f32.gmra.mrb[0].mxu0 %v358
    %v425 = vpop.f32.mrb[0].mxu0
    %v426 = vadd.f32 0.0, %v425
    %v427 = vpop.f32.mrb[0].mxu0
    %428 = vdwg.mxu0
    %v429 = vsel %vm58, %v426, -inf
    %430 = vmax.xlane.f32.xlu0 %v429
    %v431 = vpop.xlane.xlu0 %430
    %v432 = vsub.f32 %v426, %v431
    %v433 = vmul.f32 %v432, 1.442695
    %v434 = vpow.pop %v433
    %v436 = vsel %vm58, %v434, 0
    %438 = vmatprep.subr.mxu0 0.0
    %439 = vmatpush1.msra.mxu0 %v180
    %440 = vmatprep.subr.mxu0 0.0
    %441 = vmatpush1.msra.mxu0 %v181
    %442 = vmatprep.subr.mxu0 0.0
    %443 = vmatpush1.msra.mxu0 0.0
    %444 = vmatprep.subr.mxu0 0.0
    %445 = vmatpush1.msra.mxu0 0.0
    %446 = vmatprep.subr.mxu0 0.0
    %447 = vmatpush1.msra.mxu0 0.0
    %448 = vmatprep.subr.mxu0 0.0
    %449 = vmatpush1.msra.mxu0 0.0
    %450 = vmatprep.subr.mxu0 0.0
    %451 = vmatpush1.msra.mxu0 0.0
    %452 = vmatprep.subr.mxu0 0.0
    %453 = vmatpush1.msra.mxu0 0.0
    %454 = vmatprep.subr.mxu0 0.0
    %455 = vmatpush1.msra.mxu0 0.0
    %456 = vmatprep.subr.mxu0 0.0
    %457 = vmatpush1.msra.mxu0 0.0
    %458 = vmatprep.subr.mxu0 0.0
    %459 = vmatpush1.msra.mxu0 0.0
    %460 = vmatprep.subr.mxu0 0.0
    %461 = vmatpush1.msra.mxu0 0.0
    %462 = vmatprep.subr.mxu0 0.0
    %463 = vmatpush1.msra.mxu0 0.0
    %464 = vmatprep.subr.mxu0 0.0
    %465 = vmatpush1.msra.mxu0 0.0
    %466 = vmatprep.subr.mxu0 0.0
    %467 = vmatpush1.msra.mxu0 0.0
    %468 = vmatprep.subr.mxu0 0.0
    %469 = vmatpush1.msra.mxu0 0.0
    %470 = vmatprep.subr.mxu0 0.0
    %471 = vmatpush1.msra.mxu0 0.0
    %472 = vmatprep.subr.mxu0 0.0
    %473 = vmatpush1.msra.mxu0 0.0
    %474 = vmatprep.subr.mxu0 0.0
    %475 = vmatpush1.msra.mxu0 0.0
    %476 = vmatprep.subr.mxu0 0.0
    %477 = vmatpush1.msra.mxu0 0.0
    %478 = vmatprep.subr.mxu0 0.0
    %479 = vmatpush1.msra.mxu0 0.0
    %480 = vmatprep.subr.mxu0 0.0
    %481 = vmatpush1.msra.mxu0 0.0
    %482 = vmatprep.subr.mxu0 0.0
    %483 = vmatpush1.msra.mxu0 0.0
    %484 = vmatprep.subr.mxu0 0.0
    %485 = vmatpush1.msra.mxu0 0.0
    %486 = vmatprep.subr.mxu0 0.0
    %487 = vmatpush1.msra.mxu0 0.0
    %488 = vmatprep.subr.mxu0 0.0
    %489 = vmatpush1.msra.mxu0 0.0
    %490 = vmatprep.subr.mxu0 0.0
    %491 = vmatpush1.msra.mxu0 0.0
    %492 = vmatprep.subr.mxu0 0.0
    %493 = vmatpush1.msra.mxu0 0.0
    %494 = vmatprep.subr.mxu0 0.0
    %495 = vmatpush1.msra.mxu0 0.0
    %496 = vmatprep.subr.mxu0 0.0
    %497 = vmatpush1.msra.mxu0 0.0
    %498 = vmatprep.subr.mxu0 0.0
    %499 = vmatpush1.msra.mxu0 0.0
    %500 = vmatprep.subr.mxu0 0.0
    %501 = vmatpush1.msra.mxu0 0.0
    %502 = vmatprep.mubr.f32.mxu0 0.0
    %503 = vmatmul.mubr.f32.gmra.mrb[0].mxu0 %v436
    %v504 = vpop.f32.mrb[0].mxu0
    %v505 = vadd.f32 0.0, %v504
    %v506 = vpop.f32.mrb[0].mxu0
    %507 = vdwg.mxu0
    %v508 = vrcp.pop %v505
    %v509 = vmul.f32 %v434, %v508
    %v511 = vsel %vm58, %v509, 0
    %513 = vmatprep.subr.mxu0 0.0
    %514 = vmatpush1.msra.mxu0 %v182
    %515 = vmatprep.subr.mxu0 0.0
    %516 = vmatpush1.msra.mxu0 %v183
    %517 = vmatprep.subr.mxu0 0.0
    %518 = vmatpush1.msra.mxu0 0.0
    %519 = vmatprep.subr.mxu0 0.0
    %520 = vmatpush1.msra.mxu0 0.0
    %521 = vmatprep.subr.mxu0 0.0
    %522 = vmatpush1.msra.mxu0 0.0
    %523 = vmatprep.subr.mxu0 0.0
    %524 = vmatpush1.msra.mxu0 0.0
    %525 = vmatprep.subr.mxu0 0.0
    %526 = vmatpush1.msra.mxu0 0.0
    %527 = vmatprep.subr.mxu0 0.0
    %528 = vmatpush1.msra.mxu0 0.0
    %529 = vmatprep.subr.mxu0 0.0
    %530 = vmatpush1.msra.mxu0 0.0
    %531 = vmatprep.subr.mxu0 0.0
    %532 = vmatpush1.msra.mxu0 0.0
    %533 = vmatprep.subr.mxu0 0.0
    %534 = vmatpush1.msra.mxu0 0.0
    %535 = vmatprep.subr.mxu0 0.0
    %536 = vmatpush1.msra.mxu0 0.0
    %537 = vmatprep.subr.mxu0 0.0
    %538 = vmatpush1.msra.mxu0 0.0
    %539 = vmatprep.subr.mxu0 0.0
    %540 = vmatpush1.msra.mxu0 0.0
    %541 = vmatprep.subr.mxu0 0.0
    %542 = vmatpush1.msra.mxu0 0.0
    %543 = vmatprep.subr.mxu0 0.0
    %544 = vmatpush1.msra.mxu0 0.0
    %545 = vmatprep.subr.mxu0 0.0
    %546 = vmatpush1.msra.mxu0 0.0
    %547 = vmatprep.subr.mxu0 0.0
    %548 = vmatpush1.msra.mxu0 0.0
    %549 = vmatprep.subr.mxu0 0.0
    %550 = vmatpush1.msra.mxu0 0.0
    %551 = vmatprep.subr.mxu0 0.0
    %552 = vmatpush1.msra.mxu0 0.0
    %553 = vmatprep.subr.mxu0 0.0
    %554 = vmatpush1.msra.mxu0 0.0
    %555 = vmatprep.subr.mxu0 0.0
    %556 = vmatpush1.msra.mxu0 0.0
    %557 = vmatprep.subr.mxu0 0.0
    %558 = vmatpush1.msra.mxu0 0.0
    %559 = vmatprep.subr.mxu0 0.0
    %560 = vmatpush1.msra.mxu0 0.0
    %561 = vmatprep.subr.mxu0 0.0
    %562 = vmatpush1.msra.mxu0 0.0
    %563 = vmatprep.subr.mxu0 0.0
    %564 = vmatpush1.msra.mxu0 0.0
    %565 = vmatprep.subr.mxu0 0.0
    %566 = vmatpush1.msra.mxu0 0.0
    %567 = vmatprep.subr.mxu0 0.0
    %568 = vmatpush1.msra.mxu0 0.0
    %569 = vmatprep.subr.mxu0 0.0
    %570 = vmatpush1.msra.mxu0 0.0
    %571 = vmatprep.subr.mxu0 0.0
    %572 = vmatpush1.msra.mxu0 0.0
    %573 = vmatprep.subr.mxu0 0.0
    %574 = vmatpush1.msra.mxu0 0.0
    %575 = vmatprep.subr.mxu0 0.0
    %576 = vmatpush1.msra.mxu0 0.0
    %577 = vmatprep.mubr.f32.mxu0 0.0
    %578 = vmatmul.mubr.f32.gmra.mrb[0].mxu0 %v511
    %v579 = vpop.f32.mrb[0].mxu0
    %v580 = vadd.f32 0.0, %v579
    %v581 = vpop.f32.mrb[0].mxu0
    %582 = vdwg.mxu0
    %v583 = vmul.f32 %v580, %v355
    %v584 = vld [vmem:[%s5] sm:$0xff]
    %v585 = vld [vmem:[%s5 + $0x8] sm:$0xff]
    %v586 = vld [vmem:[%s5 + $0x10] sm:$0xff]
    %v587 = vld [vmem:[%s5 + $0x18] sm:$0xff]
    %v588 = vld [vmem:[%s5 + $0x20] sm:$0xff]
    %v589 = vld [vmem:[%s5 + $0x28] sm:$0xff]
    %v590 = vld [vmem:[%s5 + $0x30] sm:$0xff]
    %v591 = vld [vmem:[%s5 + $0x38] sm:$0xff]
    %v592 = vld [vmem:[%s5 + $0x40] sm:$0xff]
    %v593 = vld [vmem:[%s5 + $0x48] sm:$0xff]
    %v594 = vld [vmem:[%s5 + $0x50] sm:$0xff]
    %v595 = vld [vmem:[%s5 + $0x58] sm:$0xff]
    %v596 = vld [vmem:[%s5 + $0x60] sm:$0xff]
    %v597 = vld [vmem:[%s5 + $0x68] sm:$0xff]
    %v598 = vld [vmem:[%s5 + $0x70] sm:$0xff]
    %v599 = vld [vmem:[%s5 + $0x78] sm:$0xff]
    %v600 = vld [vmem:[%s6] sm:$0x1]
    %v602 = vlaneseq
    %v603 = vshrl.u32 %v602, 7
    %v604 = vsub.s32 0, %v603
    %v605 = vrot.slane %v600, %v604
    %607 = vmatprep.subr.mxu0 0.0
    %608 = vmatpush1.msra.mxu0 %v584
    %609 = vmatprep.subr.mxu0 0.0
    %610 = vmatpush1.msra.mxu0 %v585
    %611 = vmatprep.subr.mxu0 0.0
    %612 = vmatpush1.msra.mxu0 %v586
    %613 = vmatprep.subr.mxu0 0.0
    %614 = vmatpush1.msra.mxu0 %v587
    %615 = vmatprep.subr.mxu0 0.0
    %616 = vmatpush1.msra.mxu0 %v588
    %617 = vmatprep.subr.mxu0 0.0
    %618 = vmatpush1.msra.mxu0 %v589
    %619 = vmatprep.subr.mxu0 0.0
    %620 = vmatpush1.msra.mxu0 %v590
    %621 = vmatprep.subr.mxu0 0.0
    %622 = vmatpush1.msra.mxu0 %v591
    %623 = vmatprep.subr.mxu0 0.0
    %624 = vmatpush1.msra.mxu0 %v592
    %625 = vmatprep.subr.mxu0 0.0
    %626 = vmatpush1.msra.mxu0 %v593
    %627 = vmatprep.subr.mxu0 0.0
    %628 = vmatpush1.msra.mxu0 %v594
    %629 = vmatprep.subr.mxu0 0.0
    %630 = vmatpush1.msra.mxu0 %v595
    %631 = vmatprep.subr.mxu0 0.0
    %632 = vmatpush1.msra.mxu0 %v596
    %633 = vmatprep.subr.mxu0 0.0
    %634 = vmatpush1.msra.mxu0 %v597
    %635 = vmatprep.subr.mxu0 0.0
    %636 = vmatpush1.msra.mxu0 %v598
    %637 = vmatprep.subr.mxu0 0.0
    %638 = vmatpush1.msra.mxu0 %v599
    %639 = vmatprep.subr.mxu0 0.0
    %640 = vmatpush1.msra.mxu0 0.0
    %641 = vmatprep.subr.mxu0 0.0
    %642 = vmatpush1.msra.mxu0 0.0
    %643 = vmatprep.subr.mxu0 0.0
    %644 = vmatpush1.msra.mxu0 0.0
    %645 = vmatprep.subr.mxu0 0.0
    %646 = vmatpush1.msra.mxu0 0.0
    %647 = vmatprep.subr.mxu0 0.0
    %648 = vmatpush1.msra.mxu0 0.0
    %649 = vmatprep.subr.mxu0 0.0
    %650 = vmatpush1.msra.mxu0 0.0
    %651 = vmatprep.subr.mxu0 0.0
    %652 = vmatpush1.msra.mxu0 0.0
    %653 = vmatprep.subr.mxu0 0.0
    %654 = vmatpush1.msra.mxu0 0.0
    %655 = vmatprep.subr.mxu0 0.0
    %656 = vmatpush1.msra.mxu0 0.0
    %657 = vmatprep.subr.mxu0 0.0
    %658 = vmatpush1.msra.mxu0 0.0
    %659 = vmatprep.subr.mxu0 0.0
    %660 = vmatpush1.msra.mxu0 0.0
    %661 = vmatprep.subr.mxu0 0.0
    %662 = vmatpush1.msra.mxu0 0.0
    %663 = vmatprep.subr.mxu0 0.0
    %664 = vmatpush1.msra.mxu0 0.0
    %665 = vmatprep.subr.mxu0 0.0
    %666 = vmatpush1.msra.mxu0 0.0
    %667 = vmatprep.subr.mxu0 0.0
    %668 = vmatpush1.msra.mxu0 0.0
    %669 = vmatprep.subr.mxu0 0.0
    %670 = vmatpush1.msra.mxu0 0.0
    %671 = vmatprep.mubr.f32.mxu0 0.0
    %672 = vmatmul.mubr.f32.gmra.mrb[0].mxu0 %v583
    %v673 = vpop.f32.mrb[0].mxu0
    %v674 = vadd.f32 %v605, %v673
    %v675 = vpop.f32.mrb[0].mxu0
    %676 = vdwg.mxu0
    %v677 = vadd.f32 %v163, %v674
    %v678 = vld [vmem:[%s7] sm:$0x1]
    %v679 = vld [vmem:[%s8] sm:$0x1]
    %v680 = vsel %vm213, %v677, 0.0
    %681 = vadd.xlane.f32.xlu0 %v680
    %v682 = vpop.xlane.xlu0 %681
    %v683 = vrcp.pop 32.0
    %v684 = vmul.f32 %v682, %v683
    %v685 = vsub.f32 %v677, %v684
    %v686 = vmul.f32 %v685, %v685
    %v687 = vsel %vm213, %v686, 0.0
    %688 = vadd.xlane.f32.xlu0 %v687
    %v689 = vpop.xlane.xlu0 %688
    %v690 = vmul.f32 %v689, %v683
    %v691 = vadd.f32 %v690, 1e-05
    %v692 = vrsqrt.pop %v691
    %v693 = vmul.f32 %v685, %v692
    %v695 = vlaneseq
    %v696 = vshrl.u32 %v695, 7
    %v697 = vsub.s32 0, %v696
    %v698 = vrot.slane %v678, %v697
    %v700 = vmul.f32 %v693, %v698
    %v702 = vlaneseq
    %v703 = vshrl.u32 %v702, 7
    %v704 = vsub.s32 0, %v703
    %v705 = vrot.slane %v679, %v704
    %v707 = vadd.f32 %v700, %v705
    %v708 = vld [vmem:[%s9] sm:$0xff]
    %v709 = vld [vmem:[%s9 + $0x8] sm:$0xff]
    %v710 = vld [vmem:[%s9 + $0x10] sm:$0xff]
    %v711 = vld [vmem:[%s9 + $0x18] sm:$0xff]
    %v712 = vld [vmem:[%s10] sm:$0x1]
    %v714 = vlaneseq
    %v715 = vshrl.u32 %v714, 7
    %v716 = vsub.s32 0, %v715
    %v717 = vrot.slane %v712, %v716
    %v720 = vsel %vm213, %v707, 0
    %722 = vmatprep.subr.mxu0 0.0
    %723 = vmatpush1.msra.mxu0 %v708
    %724 = vmatprep.subr.mxu0 0.0
    %725 = vmatpush1.msra.mxu0 %v709
    %726 = vmatprep.subr.mxu0 0.0
    %727 = vmatpush1.msra.mxu0 %v710
    %728 = vmatprep.subr.mxu0 0.0
    %729 = vmatpush1.msra.mxu0 %v711
    %730 = vmatprep.subr.mxu0 0.0
    %731 = vmatpush1.msra.mxu0 0.0
    %732 = vmatprep.subr.mxu0 0.0
    %733 = vmatpush1.msra.mxu0 0.0
    %734 = vmatprep.subr.mxu0 0.0
    %735 = vmatpush1.msra.mxu0 0.0
    %736 = vmatprep.subr.mxu0 0.0
    %737 = vmatpush1.msra.mxu0 0.0
    %738 = vmatprep.subr.mxu0 0.0
    %739 = vmatpush1.msra.mxu0 0.0
    %740 = vmatprep.subr.mxu0 0.0
    %741 = vmatpush1.msra.mxu0 0.0
    %742 = vmatprep.subr.mxu0 0.0
    %743 = vmatpush1.msra.mxu0 0.0
    %744 = vmatprep.subr.mxu0 0.0
    %745 = vmatpush1.msra.mxu0 0.0
    %746 = vmatprep.subr.mxu0 0.0
    %747 = vmatpush1.msra.mxu0 0.0
    %748 = vmatprep.subr.mxu0 0.0
    %749 = vmatpush1.msra.mxu0 0.0
    %750 = vmatprep.subr.mxu0 0.0
    %751 = vmatpush1.msra.mxu0 0.0
    %752 = vmatprep.subr.mxu0 0.0
    %753 = vmatpush1.msra.mxu0 0.0
    %754 = vmatprep.subr.mxu0 0.0
    %755 = vmatpush1.msra.mxu0 0.0
    %756 = vmatprep.subr.mxu0 0.0
    %757 = vmatpush1.msra.mxu0 0.0
    %758 = vmatprep.subr.mxu0 0.0
    %759 = vmatpush1.msra.mxu0 0.0
    %760 = vmatprep.subr.mxu0 0.0
    %761 = vmatpush1.msra.mxu0 0.0
    %762 = vmatprep.subr.mxu0 0.0
    %763 = vmatpush1.msra.mxu0 0.0
    %764 = vmatprep.subr.mxu0 0.0
    %765 = vmatpush1.msra.mxu0 0.0
    %766 = vmatprep.subr.mxu0 0.0
    %767 = vmatpush1.msra.mxu0 0.0
    %768 = vmatprep.subr.mxu0 0.0
    %769 = vmatpush1.msra.mxu0 0.0
    %770 = vmatprep.subr.mxu0 0.0
    %771 = vmatpush1.msra.mxu0 0.0
    %772 = vmatprep.subr.mxu0 0.0
    %773 = vmatpush1.msra.mxu0 0.0
    %774 = vmatprep.subr.mxu0 0.0
    %775 = vmatpush1.msra.mxu0 0.0
    %776 = vmatprep.subr.mxu0 0.0
    %777 = vmatpush1.msra.mxu0 0.0
    %778 = vmatprep.subr.mxu0 0.0
    %779 = vmatpush1.msra.mxu0 0.0
    %780 = vmatprep.subr.mxu0 0.0
    %781 = vmatpush1.msra.mxu0 0.0
    %782 = vmatprep.subr.mxu0 0.0
    %783 = vmatpush1.msra.mxu0 0.0
    %784 = vmatprep.subr.mxu0 0.0
    %785 = vmatpush1.msra.mxu0 0.0
    %786 = vmatprep.mubr.f32.mxu0 0.0
    %787 = vmatmul.mubr.f32.gmra.mrb[0].mxu0 %v720
    %v788 = vpop.f32.mrb[0].mxu0
    %v789 = vadd.f32 %v717, %v788
    %v790 = vpop.f32.mrb[0].mxu0
    %791 = vdwg.mxu0
    %v792 = vmax.f32 %v789, 0.0
    %v793 = vadd.f32 %v707, %v792
    %v794 = vld [vmem:[%s11] sm:$0x1]
    %v795 = vld [vmem:[%s12] sm:$0x1]
    %v796 = vsel %vm213, %v793, 0.0
    %797 = vadd.xlane.f32.xlu0 %v796
    %v798 = vpop.xlane.xlu0 %797
    %v799 = vmul.f32 %v798, %v683
    %v800 = vsub.f32 %v793, %v799
    %v801 = vmul.f32 %v800, %v800
    %v802 = vsel %vm213, %v801, 0.0
    %803 = vadd.xlane.f32.xlu0 %v802
    %v804 = vpop.xlane.xlu0 %803
    %v805 = vmul.f32 %v804, %v683
    %v806 = vadd.f32 %v805, 1e-05
    %v807 = vrsqrt.pop %v806
    %v808 = vmul.f32 %v800, %v807
    %v810 = vlaneseq
    %v811 = vshrl.u32 %v810, 7
    %v812 = vsub.s32 0, %v811
    %v813 = vrot.slane %v794, %v812
    %v815 = vmul.f32 %v808, %v813
    %v817 = vlaneseq
    %v818 = vshrl.u32 %v817, 7
    %v819 = vsub.s32 0, %v818
    %v820 = vrot.slane %v795, %v819
    %v822 = vadd.f32 %v815, %v820
    %s823 = scalar_lea.vmem %s3, 96
    %v824 = vld [vmem:[%s823] sm:$0xff]
    %v825 = vld [vmem:[%s823 + $0x8] sm:$0xff]
    %v826 = vld [vmem:[%s823 + $0x10] sm:$0xff]
    %v827 = vld [vmem:[%s823 + $0x18] sm:$0xff]
    %v828 = vld [vmem:[%s823 + $0x20] sm:$0xff]
    %v829 = vld [vmem:[%s823 + $0x28] sm:$0xff]
    %v830 = vld [vmem:[%s823 + $0x30] sm:$0xff]
    %v831 = vld [vmem:[%s823 + $0x38] sm:$0xff]
    %v832 = vld [vmem:[%s823 + $0x40] sm:$0xff]
    %v833 = vld [vmem:[%s823 + $0x48] sm:$0xff]
    %v834 = vld [vmem:[%s823 + $0x50] sm:$0xff]
    %v835 = vld [vmem:[%s823 + $0x58] sm:$0xff]
    %s836 = scalar_lea.vmem %s4, 3
    %v837 = vld [vmem:[%s836] sm:$0x7]
    %v839 = vlaneseq
    %v840 = vshrl.u32 %v839, 7
    %v841 = vsub.s32 0, %v840
    %v842 = vrot.slane %v837, %v841
    %v843 = vlaneseq
    %v844 = vshrl.u32 %v843, 7
    %v845 = vsub.s32 1, %v844
    %v846 = vrot.slane %v837, %v845
    %v847 = vlaneseq
    %v848 = vshrl.u32 %v847, 7
    %v849 = vsub.s32 2, %v848
    %v850 = vrot.slane %v837, %v849
    %v855 = vsel %vm213, %v822, 0
    %857 = vmatprep.subr.mxu0 %v825
    %858 = vmatpush1.msra.mxu0 %v824
    %859 = vmatprep.subr.mxu0 %v828
    %860 = vmatpush1.msra.mxu0 %v827
    %861 = vmatprep.subr.mxu0 %v831
    %862 = vmatpush1.msra.mxu0 %v830
    %863 = vmatprep.subr.mxu0 %v834
    %864 = vmatpush1.msra.mxu0 %v833
    %865 = vmatprep.subr.mxu0 0.0
    %866 = vmatpush1.msra.mxu0 0.0
    %867 = vmatprep.subr.mxu0 0.0
    %868 = vmatpush1.msra.mxu0 0.0
    %869 = vmatprep.subr.mxu0 0.0
    %870 = vmatpush1.msra.mxu0 0.0
    %871 = vmatprep.subr.mxu0 0.0
    %872 = vmatpush1.msra.mxu0 0.0
    %873 = vmatprep.subr.mxu0 0.0
    %874 = vmatpush1.msra.mxu0 0.0
    %875 = vmatprep.subr.mxu0 0.0
    %876 = vmatpush1.msra.mxu0 0.0
    %877 = vmatprep.subr.mxu0 0.0
    %878 = vmatpush1.msra.mxu0 0.0
    %879 = vmatprep.subr.mxu0 0.0
    %880 = vmatpush1.msra.mxu0 0.0
    %881 = vmatprep.subr.mxu0 0.0
    %882 = vmatpush1.msra.mxu0 0.0
    %883 = vmatprep.subr.mxu0 0.0
    %884 = vmatpush1.msra.mxu0 0.0
    %885 = vmatprep.subr.mxu0 0.0
    %886 = vmatpush1.msra.mxu0 0.0
    %887 = vmatprep.subr.mxu0 0.0
    %888 = vmatpush1.msra.mxu0 0.0
    %889 = vmatprep.subr.mxu0 0.0
    %890 = vmatpush1.msra.mxu0 0.0
    %891 = vmatprep.subr.mxu0 0.0
    %892 = vmatpush1.msra.mxu0 0.0
    %893 = vmatprep.subr.mxu0 0.0
    %894 = vmatpush1.msra.mxu0 0.0
    %895 = vmatprep.subr.mxu0 0.0
    %896 = vmatpush1.msra.mxu0 0.0
    %897 = vmatprep.subr.mxu0 0.0
    %898 = vmatpush1.msra.mxu0 0.0
    %899 = vmatprep.subr.mxu0 0.0
    %900 = vmatpush1.msra.mxu0 0.0
    %901 = vmatprep.subr.mxu0 0.0
    %902 = vmatpush1.msra.mxu0 0.0
    %903 = vmatprep.subr.mxu0 0.0
    %904 = vmatpush1.msra.mxu0 0.0
    %905 = vmatprep.subr.mxu0 0.0
    %906 = vmatpush1.msra.mxu0 0.0
    %907 = vmatprep.subr.mxu0 0.0
    %908 = vmatpush1.msra.mxu0 0.0
    %909 = vmatprep.subr.mxu0 0.0
    %910 = vmatpush1.msra.mxu0 0.0
    %911 = vmatprep.subr.mxu0 0.0
    %912 = vmatpush1.msra.mxu0 0.0
    %913 = vmatprep.subr.mxu0 0.0
    %914 = vmatpush1.msra.mxu0 0.0
    %915 = vmatprep.subr.mxu0 0.0
    %916 = vmatpush1.msra.mxu0 0.0
    %917 = vmatprep.subr.mxu0 0.0
    %918 = vmatpush1.msra.mxu0 0.0
    %919 = vmatprep.subr.mxu0 0.0
    %920 = vmatpush1.msra.mxu0 0.0
    %921 = vmatprep.mubr.f32.mxu0 0.0
    %922 = vmatmul.mubr.f32.gmra.mrb[0].mxu0 %v855
    %v923 = vpop.f32.mrb[0].mxu0
    %v924 = vadd.f32 %v842, %v923
    %v925 = vpop.f32.mrb[0].mxu0
    %v926 = vadd.f32 %v846, %v925
    %927 = vdwg.mxu0
    %928 = vmatprep.subr.mxu0 0.0
    %929 = vmatpush1.msra.mxu0 %v826
    %930 = vmatprep.subr.mxu0 0.0
    %931 = vmatpush1.msra.mxu0 %v829
    %932 = vmatprep.subr.mxu0 0.0
    %933 = vmatpush1.msra.mxu0 %v832
    %934 = vmatprep.subr.mxu0 0.0
    %935 = vmatpush1.msra.mxu0 %v835
    %936 = vmatprep.subr.mxu0 0.0
    %937 = vmatpush1.msra.mxu0 0.0
    %938 = vmatprep.subr.mxu0 0.0
    %939 = vmatpush1.msra.mxu0 0.0
    %940 = vmatprep.subr.mxu0 0.0
    %941 = vmatpush1.msra.mxu0 0.0
    %942 = vmatprep.subr.mxu0 0.0
    %943 = vmatpush1.msra.mxu0 0.0
    %944 = vmatprep.subr.mxu0 0.0
    %945 = vmatpush1.msra.mxu0 0.0
    %946 = vmatprep.subr.mxu0 0.0
    %947 = vmatpush1.msra.mxu0 0.0
    %948 = vmatprep.subr.mxu0 0.0
    %949 = vmatpush1.msra.mxu0 0.0
    %950 = vmatprep.subr.mxu0 0.0
    %951 = vmatpush1.msra.mxu0 0.0
    %952 = vmatprep.subr.mxu0 0.0
    %953 = vmatpush1.msra.mxu0 0.0
    %954 = vmatprep.subr.mxu0 0.0
    %955 = vmatpush1.msra.mxu0 0.0
    %956 = vmatprep.subr.mxu0 0.0
    %957 = vmatpush1.msra.mxu0 0.0
    %958 = vmatprep.subr.mxu0 0.0
    %959 = vmatpush1.msra.mxu0 0.0
    %960 = vmatprep.subr.mxu0 0.0
    %961 = vmatpush1.msra.mxu0 0.0
    %962 = vmatprep.subr.mxu0 0.0
    %963 = vmatpush1.msra.mxu0 0.0
    %964 = vmatprep.subr.mxu0 0.0
    %965 = vmatpush1.msra.mxu0 0.0
    %966 = vmatprep.subr.mxu0 0.0
    %967 = vmatpush1.msra.mxu0 0.0
    %968 = vmatprep.subr.mxu0 0.0
    %969 = vmatpush1.msra.mxu0 0.0
    %970 = vmatprep.subr.mxu0 0.0
    %971 = vmatpush1.msra.mxu0 0.0
    %972 = vmatprep.subr.mxu0 0.0
    %973 = vmatpush1.msra.mxu0 0.0
    %974 = vmatprep.subr.mxu0 0.0
    %975 = vmatpush1.msra.mxu0 0.0
    %976 = vmatprep.subr.mxu0 0.0
    %977 = vmatpush1.msra.mxu0 0.0
    %978 = vmatprep.subr.mxu0 0.0
    %979 = vmatpush1.msra.mxu0 0.0
    %980 = vmatprep.subr.mxu0 0.0
    %981 = vmatpush1.msra.mxu0 0.0
    %982 = vmatprep.subr.mxu0 0.0
    %983 = vmatpush1.msra.mxu0 0.0
    %984 = vmatprep.subr.mxu0 0.0
    %985 = vmatpush1.msra.mxu0 0.0
    %986 = vmatprep.subr.mxu0 0.0
    %987 = vmatpush1.msra.mxu0 0.0
    %988 = vmatprep.subr.mxu0 0.0
    %989 = vmatpush1.msra.mxu0 0.0
    %990 = vmatprep.subr.mxu0 0.0
    %991 = vmatpush1.msra.mxu0 0.0
    %992 = vmatprep.mubr.f32.mxu0 0.0
    %993 = vmatmul.mubr.f32.gmra.mrb[0].mxu0 %v855
    %v994 = vpop.f32.mrb[0].mxu0
    %v995 = vadd.f32 %v850, %v994
    %v996 = vpop.f32.mrb[0].mxu0
    %997 = vdwg.mxu0
    %v998 = vmul.f32 %v924, %v926
    %999 = vmatprep.subr.mxu0 0.0
    %1000 = vmatpush1.msra.mxu0 %v164
    %1001 = vmatprep.subr.mxu0 0.0
    %1002 = vmatpush1.msra.mxu0 %v165
    %1003 = vmatprep.subr.mxu0 0.0
    %1004 = vmatpush1.msra.mxu0 %v166
    %1005 = vmatprep.subr.mxu0 0.0
    %1006 = vmatpush1.msra.mxu0 %v167
    %1007 = vmatprep.subr.mxu0 0.0
    %1008 = vmatpush1.msra.mxu0 %v168
    %1009 = vmatprep.subr.mxu0 0.0
    %1010 = vmatpush1.msra.mxu0 %v169
    %1011 = vmatprep.subr.mxu0 0.0
    %1012 = vmatpush1.msra.mxu0 %v170
    %1013 = vmatprep.subr.mxu0 0.0
    %1014 = vmatpush1.msra.mxu0 %v171
    %1015 = vmatprep.subr.mxu0 0.0
    %1016 = vmatpush1.msra.mxu0 %v172
    %1017 = vmatprep.subr.mxu0 0.0
    %1018 = vmatpush1.msra.mxu0 %v173
    %1019 = vmatprep.subr.mxu0 0.0
    %1020 = vmatpush1.msra.mxu0 %v174
    %1021 = vmatprep.subr.mxu0 0.0
    %1022 = vmatpush1.msra.mxu0 %v175
    %1023 = vmatprep.subr.mxu0 0.0
    %1024 = vmatpush1.msra.mxu0 %v176
    %1025 = vmatprep.subr.mxu0 0.0
    %1026 = vmatpush1.msra.mxu0 %v177
    %1027 = vmatprep.subr.mxu0 0.0
    %1028 = vmatpush1.msra.mxu0 %v178
    %1029 = vmatprep.subr.mxu0 0.0
    %1030 = vmatpush1.msra.mxu0 %v179
    %1031 = vmatprep.subr.mxu0 0.0
    %1032 = vmatpush1.msra.mxu0 0.0
    %1033 = vmatprep.subr.mxu0 0.0
    %1034 = vmatpush1.msra.mxu0 0.0
    %1035 = vmatprep.subr.mxu0 0.0
    %1036 = vmatpush1.msra.mxu0 0.0
    %1037 = vmatprep.subr.mxu0 0.0
    %1038 = vmatpush1.msra.mxu0 0.0
    %1039 = vmatprep.subr.mxu0 0.0
    %1040 = vmatpush1.msra.mxu0 0.0
    %1041 = vmatprep.subr.mxu0 0.0
    %1042 = vmatpush1.msra.mxu0 0.0
    %1043 = vmatprep.subr.mxu0 0.0
    %1044 = vmatpush1.msra.mxu0 0.0
    %1045 = vmatprep.subr.mxu0 0.0
    %1046 = vmatpush1.msra.mxu0 0.0
    %1047 = vmatprep.subr.mxu0 0.0
    %1048 = vmatpush1.msra.mxu0 0.0
    %1049 = vmatprep.subr.mxu0 0.0
    %1050 = vmatpush1.msra.mxu0 0.0
    %1051 = vmatprep.subr.mxu0 0.0
    %1052 = vmatpush1.msra.mxu0 0.0
    %1053 = vmatprep.subr.mxu0 0.0
    %1054 = vmatpush1.msra.mxu0 0.0
    %1055 = vmatprep.subr.mxu0 0.0
    %1056 = vmatpush1.msra.mxu0 0.0
    %1057 = vmatprep.subr.mxu0 0.0
    %1058 = vmatpush1.msra.mxu0 0.0
    %1059 = vmatprep.subr.mxu0 0.0
    %1060 = vmatpush1.msra.mxu0 0.0
    %1061 = vmatprep.subr.mxu0 0.0
    %1062 = vmatpush1.msra.mxu0 0.0
    %1063 = vmatprep.mubr.f32.mxu0 0.0
    %1064 = vmatmul.mubr.f32.gmra.mrb[0].mxu0 %v998
    %v1065 = vpop.f32.mrb[0].mxu0
    %v1066 = vadd.f32 0.0, %v1065
    %v1067 = vpop.f32.mrb[0].mxu0
    %1068 = vdwg.mxu0
    %v1069 = vsel %vm58, %v1066, -inf
    %1070 = vmax.xlane.f32.xlu0 %v1069
    %v1071 = vpop.xlane.xlu0 %1070
    %v1072 = vsub.f32 %v1066, %v1071
    %v1073 = vmul.f32 %v1072, 1.442695
    %v1074 = vpow.pop %v1073
    %v1076 = vsel %vm58, %v1074, 0
    %1078 = vmatprep.subr.mxu0 0.0
    %1079 = vmatpush1.msra.mxu0 %v180
    %1080 = vmatprep.subr.mxu0 0.0
    %1081 = vmatpush1.msra.mxu0 %v181
    %1082 = vmatprep.subr.mxu0 0.0
    %1083 = vmatpush1.msra.mxu0 0.0
    %1084 = vmatprep.subr.mxu0 0.0
    %1085 = vmatpush1.msra.mxu0 0.0
    %1086 = vmatprep.subr.mxu0 0.0
    %1087 = vmatpush1.msra.mxu0 0.0
    %1088 = vmatprep.subr.mxu0 0.0
    %1089 = vmatpush1.msra.mxu0 0.0
    %1090 = vmatprep.subr.mxu0 0.0
    %1091 = vmatpush1.msra.mxu0 0.0
    %1092 = vmatprep.subr.mxu0 0.0
    %1093 = vmatpush1.msra.mxu0 0.0
    %1094 = vmatprep.subr.mxu0 0.0
    %1095 = vmatpush1.msra.mxu0 0.0
    %1096 = vmatprep.subr.mxu0 0.0
    %1097 = vmatpush1.msra.mxu0 0.0
    %1098 = vmatprep.subr.mxu0 0.0
    %1099 = vmatpush1.msra.mxu0 0.0
    %1100 = vmatprep.subr.mxu0 0.0
    %1101 = vmatpush1.msra.mxu0 0.0
    %1102 = vmatprep.subr.mxu0 0.0
    %1103 = vmatpush1.msra.mxu0 0.0
    %1104 = vmatprep.subr.mxu0 0.0
    %1105 = vmatpush1.msra.mxu0 0.0
    %1106 = vmatprep.subr.mxu0 0.0
    %1107 = vmatpush1.msra.mxu0 0.0
    %1108 = vmatprep.subr.mxu0 0.0
    %1109 = vmatpush1.msra.mxu0 0.0
    %1110 = vmatprep.subr.mxu0 0.0
    %1111 = vmatpush1.msra.mxu0 0.0
    %1112 = vmatprep.subr.mxu0 0.0
    %1113 = vmatpush1.msra.mxu0 0.0
    %1114 = vmatprep.subr.mxu0 0.0
    %1115 = vmatpush1.msra.mxu0 0.0
    %1116 = vmatprep.subr.mxu0 0.0
    %1117 = vmatpush1.msra.mxu0 0.0
    %1118 = vmatprep.subr.mxu0 0.0
    %1119 = vmatpush1.msra.mxu0 0.0
    %1120 = vmatprep.subr.mxu0 0.0
    %1121 = vmatpush1.msra.mxu0 0.0
    %1122 = vmatprep.subr.mxu0 0.0
    %1123 = vmatpush1.msra.mxu0 0.0
    %1124 = vmatprep.subr.mxu0 0.0
    %1125 = vmatpush1.msra.mxu0 0.0
    %1126 = vmatprep.subr.mxu0 0.0
    %1127 = vmatpush1.msra.mxu0 0.0
    %1128 = vmatprep.subr.mxu0 0.0
    %1129 = vmatpush1.msra.mxu0 0.0
    %1130 = vmatprep.subr.mxu0 0.0
    %1131 = vmatpush1.msra.mxu0 0.0
    %1132 = vmatprep.subr.mxu0 0.0
    %1133 = vmatpush1.msra.mxu0 0.0
    %1134 = vmatprep.subr.mxu0 0.0
    %1135 = vmatpush1.msra.mxu0 0.0
    %1136 = vmatprep.subr.mxu0 0.0
    %1137 = vmatpush1.msra.mxu0 0.0
    %1138 = vmatprep.subr.mxu0 0.0
    %1139 = vmatpush1.msra.mxu0 0.0
    %1140 = vmatprep.subr.mxu0 0.0
    %1141 = vmatpush1.msra.mxu0 0.0
    %1142 = vmatprep.mubr.f32.mxu0 0.0
    %1143 = vmatmul.mubr.f32.gmra.mrb[0].mxu0 %v1076
    %v1144 = vpop.f32.mrb[0].mxu0
    %v1145 = vadd.f32 0.0, %v1144
    %v1146 = vpop.f32.mrb[0].mxu0
    %1147 = vdwg.mxu0
    %v1148 = vrcp.pop %v1145
    %v1149 = vmul.f32 %v1074, %v1148
    %v1151 = vsel %vm58, %v1149, 0
    %1153 = vmatprep.subr.mxu0 0.0
    %1154 = vmatpush1.msra.mxu0 %v182
    %1155 = vmatprep.subr.mxu0 0.0
    %1156 = vmatpush1.msra.mxu0 %v183
    %1157 = vmatprep.subr.mxu0 0.0
    %1158 = vmatpush1.msra.mxu0 0.0
    %1159 = vmatprep.subr.mxu0 0.0
    %1160 = vmatpush1.msra.mxu0 0.0
    %1161 = vmatprep.subr.mxu0 0.0
    %1162 = vmatpush1.msra.mxu0 0.0
    %1163 = vmatprep.subr.mxu0 0.0
    %1164 = vmatpush1.msra.mxu0 0.0
    %1165 = vmatprep.subr.mxu0 0.0
    %1166 = vmatpush1.msra.mxu0 0.0
    %1167 = vmatprep.subr.mxu0 0.0
    %1168 = vmatpush1.msra.mxu0 0.0
    %1169 = vmatprep.subr.mxu0 0.0
    %1170 = vmatpush1.msra.mxu0 0.0
    %1171 = vmatprep.subr.mxu0 0.0
    %1172 = vmatpush1.msra.mxu0 0.0
    %1173 = vmatprep.subr.mxu0 0.0
    %1174 = vmatpush1.msra.mxu0 0.0
    %1175 = vmatprep.subr.mxu0 0.0
    %1176 = vmatpush1.msra.mxu0 0.0
    %1177 = vmatprep.subr.mxu0 0.0
    %1178 = vmatpush1.msra.mxu0 0.0
    %1179 = vmatprep.subr.mxu0 0.0
    %1180 = vmatpush1.msra.mxu0 0.0
    %1181 = vmatprep.subr.mxu0 0.0
    %1182 = vmatpush1.msra.mxu0 0.0
    %1183 = vmatprep.subr.mxu0 0.0
    %1184 = vmatpush1.msra.mxu0 0.0
    %1185 = vmatprep.subr.mxu0 0.0
    %1186 = vmatpush1.msra.mxu0 0.0
    %1187 = vmatprep.subr.mxu0 0.0
    %1188 = vmatpush1.msra.mxu0 0.0
    %1189 = vmatprep.subr.mxu0 0.0
    %1190 = vmatpush1.msra.mxu0 0.0
    %1191 = vmatprep.subr.mxu0 0.0
    %1192 = vmatpush1.msra.mxu0 0.0
    %1193 = vmatprep.subr.mxu0 0.0
    %1194 = vmatpush1.msra.mxu0 0.0
    %1195 = vmatprep.subr.mxu0 0.0
    %1196 = vmatpush1.msra.mxu0 0.0
    %1197 = vmatprep.subr.mxu0 0.0
    %1198 = vmatpush1.msra.mxu0 0.0
    %1199 = vmatprep.subr.mxu0 0.0
    %1200 = vmatpush1.msra.mxu0 0.0
    %1201 = vmatprep.subr.mxu0 0.0
    %1202 = vmatpush1.msra.mxu0 0.0
    %1203 = vmatprep.subr.mxu0 0.0
    %1204 = vmatpush1.msra.mxu0 0.0
    %1205 = vmatprep.subr.mxu0 0.0
    %1206 = vmatpush1.msra.mxu0 0.0
    %1207 = vmatprep.subr.mxu0 0.0
    %1208 = vmatpush1.msra.mxu0 0.0
    %1209 = vmatprep.subr.mxu0 0.0
    %1210 = vmatpush1.msra.mxu0 0.0
    %1211 = vmatprep.subr.mxu0 0.0
    %1212 = vmatpush1.msra.mxu0 0.0
    %1213 = vmatprep.subr.mxu0 0.0
    %1214 = vmatpush1.msra.mxu0 0.0
    %1215 = vmatprep.subr.mxu0 0.0
    %1216 = vmatpush1.msra.mxu0 0.0
    %1217 = vmatprep.mubr.f32.mxu0 0.0
    %1218 = vmatmul.mubr.f32.gmra.mrb[0].mxu0 %v1151
    %v1219 = vpop.f32.mrb[0].mxu0
    %v1220 = vadd.f32 0.0, %v1219
    %v1221 = vpop.f32.mrb[0].mxu0
    %1222 = vdwg.mxu0
    %v1223 = vmul.f32 %v1220, %v995
    %s1224 = scalar_lea.vmem %s5, 128
    %v1225 = vld [vmem:[%s1224] sm:$0xff]
    %v1226 = vld [vmem:[%s1224 + $0x8] sm:$0xff]
    %v1227 = vld [vmem:[%s1224 + $0x10] sm:$0xff]
    %v1228 = vld [vmem:[%s1224 + $0x18] sm:$0xff]
    %v1229 = vld [vmem:[%s1224 + $0x20] sm:$0xff]
    %v1230 = vld [vmem:[%s1224 + $0x28] sm:$0xff]
    %v1231 = vld [vmem:[%s1224 + $0x30] sm:$0xff]
    %v1232 = vld [vmem:[%s1224 + $0x38] sm:$0xff]
    %v1233 = vld [vmem:[%s1224 + $0x40] sm:$0xff]
    %v1234 = vld [vmem:[%s1224 + $0x48] sm:$0xff]
    %v1235 = vld [vmem:[%s1224 + $0x50] sm:$0xff]
    %v1236 = vld [vmem:[%s1224 + $0x58] sm:$0xff]
    %v1237 = vld [vmem:[%s1224 + $0x60] sm:$0xff]
    %v1238 = vld [vmem:[%s1224 + $0x68] sm:$0xff]
    %v1239 = vld [vmem:[%s1224 + $0x70] sm:$0xff]
    %v1240 = vld [vmem:[%s1224 + $0x78] sm:$0xff]
    %s1241 = scalar_lea.vmem %s6, 1
    %v1242 = vld [vmem:[%s1241] sm:$0x1]
    %v1244 = vlaneseq
    %v1245 = vshrl.u32 %v1244, 7
    %v1246 = vsub.s32 0, %v1245
    %v1247 = vrot.slane %v1242, %v1246
    %1249 = vmatprep.subr.mxu0 0.0
    %1250 = vmatpush1.msra.mxu0 %v1225
    %1251 = vmatprep.subr.mxu0 0.0
    %1252 = vmatpush1.msra.mxu0 %v1226
    %1253 = vmatprep.subr.mxu0 0.0
    %1254 = vmatpush1.msra.mxu0 %v1227
    %1255 = vmatprep.subr.mxu0 0.0
    %1256 = vmatpush1.msra.mxu0 %v1228
    %1257 = vmatprep.subr.mxu0 0.0
    %1258 = vmatpush1.msra.mxu0 %v1229
    %1259 = vmatprep.subr.mxu0 0.0
    %1260 = vmatpush1.msra.mxu0 %v1230
    %1261 = vmatprep.subr.mxu0 0.0
    %1262 = vmatpush1.msra.mxu0 %v1231
    %1263 = vmatprep.subr.mxu0 0.0
    %1264 = vmatpush1.msra.mxu0 %v1232
    %1265 = vmatprep.subr.mxu0 0.0
    %1266 = vmatpush1.msra.mxu0 %v1233
    %1267 = vmatprep.subr.mxu0 0.0
    %1268 = vmatpush1.msra.mxu0 %v1234
    %1269 = vmatprep.subr.mxu0 0.0
    %1270 = vmatpush1.msra.mxu0 %v1235
    %1271 = vmatprep.subr.mxu0 0.0
    %1272 = vmatpush1.msra.mxu0 %v1236
    %1273 = vmatprep.subr.mxu0 0.0
    %1274 = vmatpush1.msra.mxu0 %v1237
    %1275 = vmatprep.subr.mxu0 0.0
    %1276 = vmatpush1.msra.mxu0 %v1238
    %1277 = vmatprep.subr.mxu0 0.0
    %1278 = vmatpush1.msra.mxu0 %v1239
    %1279 = vmatprep.subr.mxu0 0.0
    %1280 = vmatpush1.msra.mxu0 %v1240
    %1281 = vmatprep.subr.mxu0 0.0
    %1282 = vmatpush1.msra.mxu0 0.0
    %1283 = vmatprep.subr.mxu0 0.0
    %1284 = vmatpush1.msra.mxu0 0.0
    %1285 = vmatprep.subr.mxu0 0.0
    %1286 = vmatpush1.msra.mxu0 0.0
    %1287 = vmatprep.subr.mxu0 0.0
    %1288 = vmatpush1.msra.mxu0 0.0
    %1289 = vmatprep.subr.mxu0 0.0
    %1290 = vmatpush1.msra.mxu0 0.0
    %1291 = vmatprep.subr.mxu0 0.0
    %1292 = vmatpush1.msra.mxu0 0.0
    %1293 = vmatprep.subr.mxu0 0.0
    %1294 = vmatpush1.msra.mxu0 0.0
    %1295 = vmatprep.subr.mxu0 0.0
    %1296 = vmatpush1.msra.mxu0 0.0
    %1297 = vmatprep.subr.mxu0 0.0
    %1298 = vmatpush1.msra.mxu0 0.0
    %1299 = vmatprep.subr.mxu0 0.0
    %1300 = vmatpush1.msra.mxu0 0.0
    %1301 = vmatprep.subr.mxu0 0.0
    %1302 = vmatpush1.msra.mxu0 0.0
    %1303 = vmatprep.subr.mxu0 0.0
    %1304 = vmatpush1.msra.mxu0 0.0
    %1305 = vmatprep.subr.mxu0 0.0
    %1306 = vmatpush1.msra.mxu0 0.0
    %1307 = vmatprep.subr.mxu0 0.0
    %1308 = vmatpush1.msra.mxu0 0.0
    %1309 = vmatprep.subr.mxu0 0.0
    %1310 = vmatpush1.msra.mxu0 0.0
    %1311 = vmatprep.subr.mxu0 0.0
    %1312 = vmatpush1.msra.mxu0 0.0
    %1313 = vmatprep.mubr.f32.mxu0 0.0
    %1314 = vmatmul.mubr.f32.gmra.mrb[0].mxu0 %v1223
    %v1315 = vpop.f32.mrb[0].mxu0
    %v1316 = vadd.f32 %v1247, %v1315
    %v1317 = vpop.f32.mrb[0].mxu0
    %1318 = vdwg.mxu0
    %v1319 = vadd.f32 %v822, %v1316
    %s1320 = scalar_lea.vmem %s7, 1
    %v1321 = vld [vmem:[%s1320] sm:$0x1]
    %s1322 = scalar_lea.vmem %s8, 1
    %v1323 = vld [vmem:[%s1322] sm:$0x1]
    %v1324 = vsel %vm213, %v1319, 0.0
    %1325 = vadd.xlane.f32.xlu0 %v1324
    %v1326 = vpop.xlane.xlu0 %1325
    %v1327 = vmul.f32 %v1326, %v683
    %v1328 = vsub.f32 %v1319, %v1327
    %v1329 = vmul.f32 %v1328, %v1328
    %v1330 = vsel %vm213, %v1329, 0.0
    %1331 = vadd.xlane.f32.xlu0 %v1330
    %v1332 = vpop.xlane.xlu0 %1331
    %v1333 = vmul.f32 %v1332, %v683
    %v1334 = vadd.f32 %v1333, 1e-05
    %v1335 = vrsqrt.pop %v1334
    %v1336 = vmul.f32 %v1328, %v1335
    %v1338 = vlaneseq
    %v1339 = vshrl.u32 %v1338, 7
    %v1340 = vsub.s32 0, %v1339
    %v1341 = vrot.slane %v1321, %v1340
    %v1343 = vmul.f32 %v1336, %v1341
    %v1345 = vlaneseq
    %v1346 = vshrl.u32 %v1345, 7
    %v1347 = vsub.s32 0, %v1346
    %v1348 = vrot.slane %v1323, %v1347
    %v1350 = vadd.f32 %v1343, %v1348
    %s1351 = scalar_lea.vmem %s9, 32
    %v1352 = vld [vmem:[%s1351] sm:$0xff]
    %v1353 = vld [vmem:[%s1351 + $0x8] sm:$0xff]
    %v1354 = vld [vmem:[%s1351 + $0x10] sm:$0xff]
    %v1355 = vld [vmem:[%s1351 + $0x18] sm:$0xff]
    %s1356 = scalar_lea.vmem %s10, 1
    %v1357 = vld [vmem:[%s1356] sm:$0x1]
    %v1359 = vlaneseq
    %v1360 = vshrl.u32 %v1359, 7
    %v1361 = vsub.s32 0, %v1360
    %v1362 = vrot.slane %v1357, %v1361
    %v1365 = vsel %vm213, %v1350, 0
    %1367 = vmatprep.subr.mxu0 0.0
    %1368 = vmatpush1.msra.mxu0 %v1352
    %1369 = vmatprep.subr.mxu0 0.0
    %1370 = vmatpush1.msra.mxu0 %v1353
    %1371 = vmatprep.subr.mxu0 0.0
    %1372 = vmatpush1.msra.mxu0 %v1354
    %1373 = vmatprep.subr.mxu0 0.0
    %1374 = vmatpush1.msra.mxu0 %v1355
    %1375 = vmatprep.subr.mxu0 0.0
    %1376 = vmatpush1.msra.mxu0 0.0
    %1377 = vmatprep.subr.mxu0 0.0
    %1378 = vmatpush1.msra.mxu0 0.0
    %1379 = vmatprep.subr.mxu0 0.0
    %1380 = vmatpush1.msra.mxu0 0.0
    %1381 = vmatprep.subr.mxu0 0.0
    %1382 = vmatpush1.msra.mxu0 0.0
    %1383 = vmatprep.subr.mxu0 0.0
    %1384 = vmatpush1.msra.mxu0 0.0
    %1385 = vmatprep.subr.mxu0 0.0
    %1386 = vmatpush1.msra.mxu0 0.0
    %1387 = vmatprep.subr.mxu0 0.0
    %1388 = vmatpush1.msra.mxu0 0.0
    %1389 = vmatprep.subr.mxu0 0.0
    %1390 = vmatpush1.msra.mxu0 0.0
    %1391 = vmatprep.subr.mxu0 0.0
    %1392 = vmatpush1.msra.mxu0 0.0
    %1393 = vmatprep.subr.mxu0 0.0
    %1394 = vmatpush1.msra.mxu0 0.0
    %1395 = vmatprep.subr.mxu0 0.0
    %1396 = vmatpush1.msra.mxu0 0.0
    %1397 = vmatprep.subr.mxu0 0.0
    %1398 = vmatpush1.msra.mxu0 0.0
    %1399 = vmatprep.subr.mxu0 0.0
    %1400 = vmatpush1.msra.mxu0 0.0
    %1401 = vmatprep.subr.mxu0 0.0
    %1402 = vmatpush1.msra.mxu0 0.0
    %1403 = vmatprep.subr.mxu0 0.0
    %1404 = vmatpush1.msra.mxu0 0.0
    %1405 = vmatprep.subr.mxu0 0.0
    %1406 = vmatpush1.msra.mxu0 0.0
    %1407 = vmatprep.subr.mxu0 0.0
    %1408 = vmatpush1.msra.mxu0 0.0
    %1409 = vmatprep.subr.mxu0 0.0
    %1410 = vmatpush1.msra.mxu0 0.0
    %1411 = vmatprep.subr.mxu0 0.0
    %1412 = vmatpush1.msra.mxu0 0.0
    %1413 = vmatprep.subr.mxu0 0.0
    %1414 = vmatpush1.msra.mxu0 0.0
    %1415 = vmatprep.subr.mxu0 0.0
    %1416 = vmatpush1.msra.mxu0 0.0
    %1417 = vmatprep.subr.mxu0 0.0
    %1418 = vmatpush1.msra.mxu0 0.0
    %1419 = vmatprep.subr.mxu0 0.0
    %1420 = vmatpush1.msra.mxu0 0.0
    %1421 = vmatprep.subr.mxu0 0.0
    %1422 = vmatpush1.msra.mxu0 0.0
    %1423 = vmatprep.subr.mxu0 0.0
    %1424 = vmatpush1.msra.mxu0 0.0
    %1425 = vmatprep.subr.mxu0 0.0
    %1426 = vmatpush1.msra.mxu0 0.0
    %1427 = vmatprep.subr.mxu0 0.0
    %1428 = vmatpush1.msra.mxu0 0.0
    %1429 = vmatprep.subr.mxu0 0.0
    %1430 = vmatpush1.msra.mxu0 0.0
    %1431 = vmatprep.mubr.f32.mxu0 0.0
    %1432 = vmatmul.mubr.f32.gmra.mrb[0].mxu0 %v1365
    %v1433 = vpop.f32.mrb[0].mxu0
    %v1434 = vadd.f32 %v1362, %v1433
    %v1435 = vpop.f32.mrb[0].mxu0
    %1436 = vdwg.mxu0
    %v1437 = vmax.f32 %v1434, 0.0
    %v1438 = vadd.f32 %v1350, %v1437
    %s1439 = scalar_lea.vmem %s11, 1
    %v1440 = vld [vmem:[%s1439] sm:$0x1]
    %s1441 = scalar_lea.vmem %s12, 1
    %v1442 = vld [vmem:[%s1441] sm:$0x1]
    %v1443 = vsel %vm213, %v1438, 0.0
    %1444 = vadd.xlane.f32.xlu0 %v1443
    %v1445 = vpop.xlane.xlu0 %1444
    %v1446 = vmul.f32 %v1445, %v683
    %v1447 = vsub.f32 %v1438, %v1446
    %v1448 = vmul.f32 %v1447, %v1447
    %v1449 = vsel %vm213, %v1448, 0.0
    %1450 = vadd.xlane.f32.xlu0 %v1449
    %v1451 = vpop.xlane.xlu0 %1450
    %v1452 = vmul.f32 %v1451, %v683
    %v1453 = vadd.f32 %v1452, 1e-05
    %v1454 = vrsqrt.pop %v1453
    %v1455 = vmul.f32 %v1447, %v1454
    %v1457 = vlaneseq
    %v1458 = vshrl.u32 %v1457, 7
    %v1459 = vsub.s32 0, %v1458
    %v1460 = vrot.slane %v1440, %v1459
    %v1462 = vmul.f32 %v1455, %v1460
    %v1464 = vlaneseq
    %v1465 = vshrl.u32 %v1464, 7
    %v1466 = vsub.s32 0, %v1465
    %v1467 = vrot.slane %v1442, %v1466
    %v1469 = vadd.f32 %v1462, %v1467
    %v1470 = vld [vmem:[%s16] sm:$0xff]
    %v1471 = vld [vmem:[%s16 + $0x8] sm:$0xff]
    %v1472 = vld [vmem:[%s16 + $0x10] sm:$0xff]
    %v1473 = vld [vmem:[%s16 + $0x18] sm:$0xff]
    %v1475 = vsel %vm213, %v1469, 0
    %1477 = vmatprep.subr.mxu0 0.0
    %1478 = vmatpush1.msra.mxu0 %v1470
    %1479 = vmatprep.subr.mxu0 0.0
    %1480 = vmatpush1.msra.mxu0 %v1471
    %1481 = vmatprep.subr.mxu0 0.0
    %1482 = vmatpush1.msra.mxu0 %v1472
    %1483 = vmatprep.subr.mxu0 0.0
    %1484 = vmatpush1.msra.mxu0 %v1473
    %1485 = vmatprep.subr.mxu0 0.0
    %1486 = vmatpush1.msra.mxu0 0.0
    %1487 = vmatprep.subr.mxu0 0.0
    %1488 = vmatpush1.msra.mxu0 0.0
    %1489 = vmatprep.subr.mxu0 0.0
    %1490 = vmatpush1.msra.mxu0 0.0
    %1491 = vmatprep.subr.mxu0 0.0
    %1492 = vmatpush1.msra.mxu0 0.0
    %1493 = vmatprep.subr.mxu0 0.0
    %1494 = vmatpush1.msra.mxu0 0.0
    %1495 = vmatprep.subr.mxu0 0.0
    %1496 = vmatpush1.msra.mxu0 0.0
    %1497 = vmatprep.subr.mxu0 0.0
    %1498 = vmatpush1.msra.mxu0 0.0
    %1499 = vmatprep.subr.mxu0 0.0
    %1500 = vmatpush1.msra.mxu0 0.0
    %1501 = vmatprep.subr.mxu0 0.0
    %1502 = vmatpush1.msra.mxu0 0.0
    %1503 = vmatprep.subr.mxu0 0.0
    %1504 = vmatpush1.msra.mxu0 0.0
    %1505 = vmatprep.subr.mxu0 0.0
    %1506 = vmatpush1.msra.mxu0 0.0
    %1507 = vmatprep.subr.mxu0 0.0
    %1508 = vmatpush1.msra.mxu0 0.0
    %1509 = vmatprep.subr.mxu0 0.0
    %1510 = vmatpush1.msra.mxu0 0.0
    %1511 = vmatprep.subr.mxu0 0.0
    %1512 = vmatpush1.msra.mxu0 0.0
    %1513 = vmatprep.subr.mxu0 0.0
    %1514 = vmatpush1.msra.mxu0 0.0
    %1515 = vmatprep.subr.mxu0 0.0
    %1516 = vmatpush1.msra.mxu0 0.0
    %1517 = vmatprep.subr.mxu0 0.0
    %1518 = vmatpush1.msra.mxu0 0.0
    %1519 = vmatprep.subr.mxu0 0.0
    %1520 = vmatpush1.msra.mxu0 0.0
    %1521 = vmatprep.subr.mxu0 0.0
    %1522 = vmatpush1.msra.mxu0 0.0
    %1523 = vmatprep.subr.mxu0 0.0
    %1524 = vmatpush1.msra.mxu0 0.0
    %1525 = vmatprep.subr.mxu0 0.0
    %1526 = vmatpush1.msra.mxu0 0.0
    %1527 = vmatprep.subr.mxu0 0.0
    %1528 = vmatpush1.msra.mxu0 0.0
    %1529 = vmatprep.subr.mxu0 0.0
    %1530 = vmatpush1.msra.mxu0 0.0
    %1531 = vmatprep.subr.mxu0 0.0
    %1532 = vmatpush1.msra.mxu0 0.0
    %1533 = vmatprep.subr.mxu0 0.0
    %1534 = vmatpush1.msra.mxu0 0.0
    %1535 = vmatprep.subr.mxu0 0.0
    %1536 = vmatpush1.msra.mxu0 0.0
    %1537 = vmatprep.subr.mxu0 0.0
    %1538 = vmatpush1.msra.mxu0 0.0
    %1539 = vmatprep.subr.mxu0 0.0
    %1540 = vmatpush1.msra.mxu0 0.0
    %1541 = vmatprep.mubr.f32.mxu0 0.0
    %1542 = vmatmul.mubr.f32.gmra.mrb[0].mxu0 %v1475
    %v1543 = vpop.f32.mrb[0].mxu0
    %v1544 = vadd.f32 0.0, %v1543
    %v1545 = vpop.f32.mrb[0].mxu0
    %1546 = vdwg.mxu0
    %1547 = vst [vmem:[#allocation2] sm:$0xff] %v1544
    // Predicated region
    $region70: #{vector_transformer.1} parent=1 // pred_check
      _
    $region71: #{vector_transformer.1} parent=1 // pred_check_branch
      %1549 = sbr.rel (0) target = $region73
    $region72: #{vector_transformer.1} parent=1 // pred_region
      %s1551 = ssub.s32 128, 128
      %1552 = vsyncadd [#allocation3], %s1551
      %s1554 = sshll.u32 [#allocation2], 4
      %s1555 = int_to_ptr.vmem [resolvable:$true] %s1554
      %1557 = dma.vmem_to_hbm [thread:$0]  %s1555, 128, %s17, [#allocation3]
    $region73: #{vector_transformer.1} parent=1 // pred_fallthru
      _
    // Predicated region
    $region74: #{vector_transformer.1} parent=1 // pred_check
      _
    $region75: #{vector_transformer.1} parent=1 // pred_check_branch
      %1559 = sbr.rel (0) target = $region77
    $region76: #{vector_transformer.1} parent=1 // pred_region
      %1560 = dma.done [#allocation3], 128
    $region77: #{vector_transformer.1} parent=1 // pred_fallthru
      _
    %1561 = vsyncpa [#allocation3], 1

</llo_original>
